<compile_context>
chip_gen: v7x
topology: tpu7x:2x2x1
jax: 0.10.0
libtpu: 0.0.40
codegen_flags: <defaults>
</compile_context>

<pallas_src>
import functools

import numpy as np

import jax
import jax.numpy as jnp
from jax.experimental import pallas as pl
from jax.experimental.pallas import tpu as pltpu

BN_EPS = 1e-5
LANE = 128


# ------------------------------------------------------------------------------
# Kernels
# ------------------------------------------------------------------------------

def gcn_stage1_kernel(col_off_ref, ahat_ref, z1_ref, w2_ref, vec_ref, z2_ref):
    """Row tile of: z2 = relu(A_hat @ z1 + shift1) @ W2f + b2f.

    z1 = x @ W1f + b1f is precomputed in JAX (bf16).  BN1/BN2 scales are
    pre-folded into (W1f, b1f) / (W2f, b2f); only per-channel shifts remain.
    The A_hat tile covers only the column band holding this row tile's graphs
    (block-diagonal adjacency), so only that band of z1 is streamed.
    """
    del col_off_ref  # consumed by the index_maps only
    vec = vec_ref[...]                                   # [1, 128] packed vectors
    shift1 = vec[:, 0:32]
    b2f = vec[:, 32:96]

    agg1 = jnp.dot(ahat_ref[...], z1_ref[...],
                   preferred_element_type=jnp.float32)   # [T, 32]
    h1 = jnp.maximum(agg1 + shift1, 0.0)                 # BN1 shift + ReLU
    # F.dropout(training=False) -> identity.
    z2 = jnp.dot(h1, w2_ref[...], preferred_element_type=jnp.float32) + b2f
    z2_ref[...] = z2.astype(jnp.bfloat16)                # [T, 64]


def encoder_stage2_kernel(col_off_ref, ahat_ref, z2_ref, pool_ref, w3_ref,
                          vec_ref, part_ref):
    """Row tile: layer-2 aggregation (+BN2, ReLU), lin_1, gated pooling partial."""
    del col_off_ref
    vec = vec_ref[...]                                   # [3, 128] packed vectors
    shift2 = vec[0:1, 0:64]
    bg = vec[0:1, 64:65]
    b3 = vec[1:2, 0:LANE]
    wg = vec[2:3, 0:LANE]

    agg2 = jnp.dot(ahat_ref[...], z2_ref[...],
                   preferred_element_type=jnp.float32)   # [T, 64]
    h2 = jnp.maximum(agg2 + shift2, 0.0)
    h3 = jnp.dot(h2, w3_ref[...], preferred_element_type=jnp.float32) + b3
    h3 = jnp.maximum(h3, 0.0)                            # [T, 128]

    # Gated attention as VPU multiply + XLU lane reduction (no 1-lane matmul).
    attn = jnp.sum(h3 * wg, axis=-1, keepdims=True) + bg  # [T, 1]
    g = (h3 * attn).astype(jnp.bfloat16)

    # Per-tile partial of the graph pooling.  Summed over tiles in JAX so this
    # grid axis stays fully parallel (no carried accumulator -> megacore OK).
    part_ref[0] = jnp.dot(pool_ref[...], g, preferred_element_type=jnp.float32)


# ------------------------------------------------------------------------------
# Glue (plain JAX)
# ------------------------------------------------------------------------------

def build_norm_adj(edge_index, num_nodes):
    """Dense D^-1/2 (A + I) D^-1/2 matching PyG GCNLayer semantics."""
    row, col = edge_index[0], edge_index[1]
    loops = jnp.arange(num_nodes, dtype=edge_index.dtype)
    row = jnp.concatenate([row, loops])
    col = jnp.concatenate([col, loops])
    deg = jnp.zeros((num_nodes,), jnp.float32).at[col].add(1.0)
    dinv = jnp.where(deg > 0, 1.0 / jnp.sqrt(deg), 0.0)   # inf -> 0 guard
    norm = dinv[row] * dinv[col]
    # out[i] = sum over edges (j -> i) of norm * h[j]  =>  A_hat[i, j] += norm
    return jnp.zeros((num_nodes, num_nodes), jnp.float32).at[col, row].add(norm)


def _fold_bn(w, b, bn):
    """Fold eval-mode BatchNorm into the preceding Linear (per-column scale)."""
    gamma, beta, rmean, rvar = bn
    s = gamma * jax.lax.rsqrt(rvar + BN_EPS)          # [1, C]
    return w * s, b * s, beta - rmean * s


def _round_up(x, m):
    return -(-x // m) * m


def _vmem_bytes(tile, window, num_graphs):
    """Rough double-buffered working-set upper bound (stage-2 dominates)."""
    ahat = 2 * tile * window * 2                      # bf16 A_hat band, 2 buffers
    zin = 2 * window * 64 * 2                         # bf16 z band
    zout = 2 * tile * 64 * 2                          # bf16 z2 out / f32-ish slack
    pool = 2 * num_graphs * tile * 2
    part = 2 * num_graphs * LANE * 4
    weights = 64 * LANE * 4 + 32 * 64 * 4 + 4 * LANE * 4
    return ahat + zin + zout + pool + part + weights


def _vmem_limit(tile, window, num_graphs):
    est = _vmem_bytes(tile, window, num_graphs)
    # 2x headroom for compiler scratch; cap well under v7x's 64 MiB/TC.
    return int(min(max(2 * est, 16 * 1024 * 1024), 48 * 1024 * 1024))


def _plan_tiles(batch_np, edge_np, n_orig, n_pad, num_graphs,
                vmem_budget=24 * 1024 * 1024):
    """Host-side: pick row tile, A_hat column window and per-tile window offsets.

    Assumes standard PyG batching (sorted batch_idx, no cross-graph edges);
    falls back to the full column width otherwise.
    """
    sorted_batch = bool(np.all(np.diff(batch_np) >= 0))
    valid_ids = bool(batch_np.size == 0 or
                     (batch_np.min() >= 0 and batch_np.max() < num_graphs))
    intra_graph = True
    if edge_np.size:
        intra_graph = bool(np.all(batch_np[edge_np[0]] == batch_np[edge_np[1]]))
    blockdiag = sorted_batch and valid_ids and intra_graph

    if blockdiag:
        gids = np.arange(num_graphs)
        starts = np.searchsorted(batch_np, gids, side="left")
        ends = np.searchsorted(batch_np, gids, side="right")

    win_cands = [w for w in range(LANE, n_pad + 1, LANE) if n_pad % w == 0]

    def windows_for(tile):
        n_tiles = n_pad // tile
        lo = np.zeros(n_tiles, np.int64)
        hi = np.ones(n_tiles, np.int64)
        for i in range(n_tiles):
            r0 = i * tile
            r1 = min((i + 1) * tile, n_orig) - 1
            if r0 < n_orig:
                lo[i] = starts[batch_np[r0]]
                hi[i] = ends[batch_np[r1]]
        for w in win_cands:
            if np.all(lo // w == (hi - 1) // w):
                return w, (lo // w).astype(np.int32)
        return n_pad, np.zeros(n_tiles, np.int32)

    best = None
    for tile in (1024, 512, 256, 128):
        if n_pad % tile:
            continue
        if blockdiag:
            window, off = windows_for(tile)
        else:
            window, off = n_pad, np.zeros(n_pad // tile, np.int32)
        best = (tile, window, off)                 # tile=128 kept as fallback
        if _vmem_bytes(tile, window, num_graphs) <= vmem_budget:
            return best
    return best


@functools.partial(
    jax.jit,
    static_argnames=("num_graphs", "latent_dim", "n_pad", "tile", "window"))
def _encoder_forward_padded(params, x, edge_index, batch_idx, col_off,
                            num_graphs, latent_dim, n_pad, tile, window):
    n_orig = x.shape[0]
    n_tiles = n_pad // tile
    two_l = 2 * latent_dim
    pad_n = n_pad - n_orig

    # bf16 normalized adjacency + pooling matrices, zero-padded to n_pad
    # (padded rows/cols are all-zero -> padded nodes never affect the output).
    ahat = build_norm_adj(edge_index, n_orig)
    ahat = jnp.pad(ahat, ((0, pad_n), (0, pad_n))).astype(jnp.bfloat16)      # [Np, Np]
    pool = jax.nn.one_hot(batch_idx, num_graphs, dtype=jnp.bfloat16).T       # [B, N]
    pool = jnp.pad(pool, ((0, 0), (0, pad_n)))                               # [B, Np]

    # Fold eval-mode BatchNorm into the GCN Linears.
    w1f, b1f, shift1 = _fold_bn(params["w1"], params["b1"], params["bn1"])
    w2f, b2f, shift2 = _fold_bn(params["w2"], params["b2"], params["bn2"])

    # conv1's Linear once in JAX (K=8 degenerate MXU pass, don't redo per tile).
    x_pad = jnp.pad(x.astype(jnp.float32), ((0, pad_n), (0, 0)))
    z1 = (x_pad @ w1f + b1f).astype(jnp.bfloat16)                            # [Np, 32]

    # Packed small-vector refs (one per kernel).
    vec_a = jnp.concatenate(
        [shift1, b2f, jnp.zeros((1, LANE - 96), jnp.float32)], axis=1)       # [1, 128]
    vec_b = jnp.concatenate([
        jnp.concatenate([shift2, params["bg"].reshape(1, 1),
                         jnp.zeros((1, LANE - 65), jnp.float32)], axis=1),
        params["b3"],
        params["wg"].reshape(1, LANE),
    ], axis=0)                                                               # [3, 128]

    vmem_limit = _vmem_limit(tile, window, num_graphs)

    # ---- stage 1: conv1 aggregation (+BN1, ReLU) + conv2's Linear, row-tiled --
    z2 = pl.pallas_call(
        gcn_stage1_kernel,
        out_shape=jax.ShapeDtypeStruct((n_pad, 64), jnp.bfloat16),
        grid_spec=pltpu.PrefetchScalarGridSpec(
            num_scalar_prefetch=1,
            grid=(n_tiles,),
            in_specs=[
                pl.BlockSpec((tile, window), lambda i, off: (i, off[i])),    # A_hat band
                pl.BlockSpec((window, 32), lambda i, off: (off[i], 0)),      # z1 band
                pl.BlockSpec((32, 64), lambda i, off: (0, 0)),               # W2f
                pl.BlockSpec((1, LANE), lambda i, off: (0, 0)),              # packed vecs
            ],
            out_specs=pl.BlockSpec((tile, 64), lambda i, off: (i, 0)),
        ),
        compiler_params=pltpu.CompilerParams(
            dimension_semantics=("parallel",),
            vmem_limit_bytes=vmem_limit),
    )(col_off, ahat, z1, w2f, vec_a)

    # ---- stage 2: conv2 aggregation (+BN2, ReLU), lin_1, gated pool partials --
    partials = pl.pallas_call(
        encoder_stage2_kernel,
        out_shape=jax.ShapeDtypeStruct((n_tiles, num_graphs, LANE), jnp.float32),
        grid_spec=pltpu.PrefetchScalarGridSpec(
            num_scalar_prefetch=1,
            grid=(n_tiles,),
            in_specs=[
                pl.BlockSpec((tile, window), lambda i, off: (i, off[i])),    # A_hat band
                pl.BlockSpec((window, 64), lambda i, off: (off[i], 0)),      # z2 band
                pl.BlockSpec((num_graphs, tile), lambda i, off: (0, i)),     # pool cols
                pl.BlockSpec((64, LANE), lambda i, off: (0, 0)),             # W3
                pl.BlockSpec((3, LANE), lambda i, off: (0, 0)),              # packed vecs
            ],
            out_specs=pl.BlockSpec((1, num_graphs, LANE),
                                   lambda i, off: (i, 0, 0)),
        ),
        compiler_params=pltpu.CompilerParams(
            dimension_semantics=("parallel",),
            vmem_limit_bytes=vmem_limit),
    )(col_off, ahat, z2, pool, params["w3"], vec_b)

    # Tiny epilogue in JAX: sum tile partials, fused mean|log_std heads.
    pooled = jnp.sum(partials, axis=0)                                       # [B, 128]
    whead = jnp.concatenate([params["wm"], params["ws"]], axis=1)            # [128, 2L]
    bhead = jnp.concatenate([params["bm"], params["bs"]], axis=1)            # [1, 2L]
    out = pooled @ whead + bhead                                             # [B, 2L]
    return out[:, :latent_dim], out[:, latent_dim:]


def graph_encoder_forward(params, x, edge_index, batch_idx, num_graphs, latent_dim):
    """Host-side planning (padding, tile/window selection) + jitted forward."""
    n_orig = x.shape[0]
    n_pad = max(LANE, _round_up(n_orig, LANE))
    batch_np = np.asarray(jax.device_get(batch_idx))
    edge_np = np.asarray(jax.device_get(edge_index))
    tile, window, col_off = _plan_tiles(batch_np, edge_np, n_orig, n_pad, num_graphs)
    return _encoder_forward_padded(
        params, x, edge_index, batch_idx, jnp.asarray(col_off, jnp.int32),
        num_graphs=num_graphs, latent_dim=latent_dim,
        n_pad=int(n_pad), tile=int(tile), window=int(window))


# ------------------------------------------------------------------------------
# Parameter init (matches the PyTorch module layout; weights pre-transposed)
# ------------------------------------------------------------------------------

def _linear_params(key, in_c, out_c):
    kw, kb = jax.random.split(key)
    bound = 1.0 / (in_c ** 0.5)
    w = jax.random.uniform(kw, (in_c, out_c), jnp.float32, -bound, bound)
    b = jax.random.uniform(kb, (1, out_c), jnp.float32, -bound, bound)
    return w, b


def _bn_params(key, c):
    k1, k2, k3, k4 = jax.random.split(key, 4)
    gamma = 1.0 + 0.1 * jax.random.normal(k1, (1, c), jnp.float32)
    beta = 0.1 * jax.random.normal(k2, (1, c), jnp.float32)
    rmean = 0.1 * jax.random.normal(k3, (1, c), jnp.float32)
    rvar = 1.0 + 0.1 * jnp.abs(jax.random.normal(k4, (1, c), jnp.float32))
    return gamma, beta, rmean, rvar


def init_params(key, num_features, hidden_dim, latent_dim):
    assert hidden_dim == 128, "GCN.lin_1 hardwires hidden_dim to 128"
    keys = jax.random.split(key, 8)
    w1, b1 = _linear_params(keys[0], num_features, 32)
    bn1 = _bn_params(keys[1], 32)
    w2, b2 = _linear_params(keys[2], 32, 64)
    bn2 = _bn_params(keys[3], 64)
    w3, b3 = _linear_params(keys[4], 64, 128)
    wg, bg = _linear_params(keys[5], hidden_dim, 1)
    wm, bm = _linear_params(keys[6], hidden_dim, latent_dim)
    ws, bs = _linear_params(keys[7], hidden_dim, latent_dim)
    return dict(w1=w1, b1=b1, bn1=bn1, w2=w2, b2=b2, bn2=bn2,
                w3=w3, b3=b3, wg=wg, bg=bg, wm=wm, bm=bm, ws=ws, bs=bs)


# ------------------------------------------------------------------------------
# Pure-JAX f32 reference (mirrors the PyTorch forward, eval mode)
# ------------------------------------------------------------------------------

def reference_forward(params, x, edge_index, batch_idx, num_graphs):
    ahat = build_norm_adj(edge_index, x.shape[0])

    def bn(h, p):
        gamma, beta, rmean, rvar = p
        return (h - rmean) * jax.lax.rsqrt(rvar + BN_EPS) * gamma + beta

    h = ahat @ (x @ params["w1"] + params["b1"])
    h = jnp.maximum(bn(h, params["bn1"]), 0.0)
    h = ahat @ (h @ params["w2"] + params["b2"])
    h = jnp.maximum(bn(h, params["bn2"]), 0.0)
    h = jnp.maximum(h @ params["w3"] + params["b3"], 0.0)
    attn = h @ params["wg"] + params["bg"]
    g = h * attn
    pool = jax.nn.one_hot(batch_idx, num_graphs, dtype=jnp.float32).T
    pooled = pool @ g
    return pooled @ params["wm"] + params["bm"], pooled @ params["ws"] + params["bs"]


if __name__ == "__main__":
    NUM_FEATURES = 8
    HIDDEN_DIM = 128    # required: GCN.lin_1 outputs 128
    LATENT_DIM = 16
    NODES_PER_GRAPH = 8
    NUM_GRAPHS = 2
    N = NODES_PER_GRAPH * NUM_GRAPHS

    key = jax.random.PRNGKey(0)
    k_params, k_x = jax.random.split(key)

    params = init_params(k_params, NUM_FEATURES, HIDDEN_DIM, LATENT_DIM)
    x = jax.random.normal(k_x, (N, NUM_FEATURES), jnp.float32)

    # deterministic edge_index: bidirectional ring inside each graph
    edges = []
    for gi in range(NUM_GRAPHS):
        off = gi * NODES_PER_GRAPH
        for i in range(NODES_PER_GRAPH):
            a = off + i
            b = off + (i + 1) % NODES_PER_GRAPH
            edges.append((a, b))
            edges.append((b, a))
    edge_index = jnp.asarray(edges, dtype=jnp.int32).T          # [2, E]
    batch_idx = jnp.repeat(jnp.arange(NUM_GRAPHS, dtype=jnp.int32), NODES_PER_GRAPH)

    mean, log_std = graph_encoder_forward(
        params, x, edge_index, batch_idx, NUM_GRAPHS, LATENT_DIM)
    jax.block_until_ready((mean, log_std))
    assert mean.shape == (NUM_GRAPHS, LATENT_DIM)
    assert log_std.shape == (NUM_GRAPHS, LATENT_DIM)

    # Validate against the f32 reference (loose tolerance: A_hat matmuls in bf16).
    ref_mean, ref_log_std = reference_forward(params, x, edge_index, batch_idx, NUM_GRAPHS)
    assert jnp.allclose(mean, ref_mean, atol=5e-2, rtol=5e-2), \
        float(jnp.max(jnp.abs(mean - ref_mean)))
    assert jnp.allclose(log_std, ref_log_std, atol=5e-2, rtol=5e-2), \
        float(jnp.max(jnp.abs(log_std - ref_log_std)))

    print("KERNEL_OK")
</pallas_src>

<mosaic_0001>
module attributes {stable_mosaic.version = 11 : i64} {
  func.func private @main(%arg0: i32) attributes {dimension_semantics = [#tpu.dimension_semantics<core_parallel>], iteration_bounds = array<i64: 2>, tpu.core_type = #tpu.core_type<sc_scalar_subcore>, window_params = []} {
    return
  }
}

module attributes {stable_mosaic.version = 11 : i64} {
  func.func private @main(%arg0: i32) attributes {dimension_semantics = [#tpu.dimension_semantics<core_parallel>], iteration_bounds = array<i64: 2>, tpu.core_type = #tpu.core_type<sc_scalar_subcore>, window_params = []} {
    return
  }
}

module attributes {stable_mosaic.version = 11 : i64} {
  func.func @gcn_stage1_kernel(%arg0: i32, %arg1: memref<1xi32, #tpu.memory_space<smem>>, %arg2: memref<128x128xbf16, #tpu.memory_space<vmem>>, %arg3: memref<128x32xbf16, #tpu.memory_space<vmem>>, %arg4: memref<32x64xf32, #tpu.memory_space<vmem>>, %arg5: memref<1x128xf32, #tpu.memory_space<vmem>>, %arg6: memref<128x64xbf16, #tpu.memory_space<vmem>>) attributes {dimension_semantics = [#tpu.dimension_semantics<parallel>], iteration_bounds = array<i64: 1>, scalar_prefetch = 1 : i64, scratch_operands = 0 : i64, tpu.core_type = #tpu.core_type<tc>, window_params = [{transform_indices = @transform_0, window_bounds = array<i64: 128, 128>}, {transform_indices = @transform_1, window_bounds = array<i64: 128, 32>}, {pipeline_mode = #tpu.pipeline_mode<synchronous>, transform_indices = @transform_2, window_bounds = array<i64: 32, 64>}, {pipeline_mode = #tpu.pipeline_mode<synchronous>, transform_indices = @transform_3, window_bounds = array<i64: 1, 128>}, {transform_indices = @transform_4, window_bounds = array<i64: 128, 64>}]} {
    %c0 = arith.constant 0 : index
    %c0_0 = arith.constant 0 : index
    %0 = vector.load %arg5[%c0, %c0_0] : memref<1x128xf32, #tpu.memory_space<vmem>>, vector<1x128xf32>
    %1 = vector.extract_strided_slice %0 {offsets = [0, 0], sizes = [1, 32], strides = [1, 1]} : vector<1x128xf32> to vector<1x32xf32>
    %2 = vector.extract_strided_slice %0 {offsets = [0, 32], sizes = [1, 64], strides = [1, 1]} : vector<1x128xf32> to vector<1x64xf32>
    %c0_1 = arith.constant 0 : index
    %c0_2 = arith.constant 0 : index
    %3 = vector.load %arg2[%c0_1, %c0_2] : memref<128x128xbf16, #tpu.memory_space<vmem>>, vector<128x128xbf16>
    %c0_3 = arith.constant 0 : index
    %c0_4 = arith.constant 0 : index
    %4 = vector.load %arg3[%c0_3, %c0_4] : memref<128x32xbf16, #tpu.memory_space<vmem>>, vector<128x32xbf16>
    %cst = arith.constant dense<0.000000e+00> : vector<128x32xf32>
    %5 = tpu.matmul %3, %4, %cst {dimension_numbers = #tpu.dot_dimension_numbers<[1], [0], [0], [1], [0, 0, 1, 1], [], []>} : vector<128x128xbf16>, vector<128x32xbf16>, vector<128x32xf32> -> vector<128x32xf32>
    %6 = vector.broadcast %1 : vector<1x32xf32> to vector<128x32xf32>
    %7 = arith.addf %5, %6 : vector<128x32xf32>
    %cst_5 = arith.constant 0.000000e+00 : f32
    %8 = vector.broadcast %cst_5 : f32 to vector<128x32xf32>
    %9 = arith.maximumf %7, %8 : vector<128x32xf32>
    %c0_6 = arith.constant 0 : index
    %c0_7 = arith.constant 0 : index
    %10 = vector.load %arg4[%c0_6, %c0_7] : memref<32x64xf32, #tpu.memory_space<vmem>>, vector<32x64xf32>
    %cst_8 = arith.constant dense<0.000000e+00> : vector<128x64xf32>
    %11 = tpu.matmul %9, %10, %cst_8 {dimension_numbers = #tpu.dot_dimension_numbers<[1], [0], [0], [1], [0, 0, 1, 1], [], []>} : vector<128x32xf32>, vector<32x64xf32>, vector<128x64xf32> -> vector<128x64xf32>
    %12 = vector.broadcast %2 : vector<1x64xf32> to vector<128x64xf32>
    %13 = arith.addf %11, %12 : vector<128x64xf32>
    %14 = arith.truncf %13 : vector<128x64xf32> to vector<128x64xbf16>
    %c0_9 = arith.constant 0 : index
    %c0_10 = arith.constant 0 : index
    %15 = vector.load %arg6[%c0_9, %c0_10] : memref<128x64xbf16, #tpu.memory_space<vmem>>, vector<128x64xbf16>
    tpu.vector_store %arg6[%c0_9, %c0_10], %14 {strides = array<i32>} : memref<128x64xbf16, #tpu.memory_space<vmem>>, vector<128x64xbf16>,
    return
  }
  func.func @transform_0(%arg0: i32, %arg1: memref<1xi32, #tpu.memory_space<smem>>) -> (i32, i32) {
    %0 = arith.index_cast %arg0 : i32 to index
    %1 = memref.load %arg1[%0] : memref<1xi32, #tpu.memory_space<smem>>
    %c0_i32 = arith.constant 0 : i32
    return %arg0, %1 : i32, i32
  }
  func.func @transform_1(%arg0: i32, %arg1: memref<1xi32, #tpu.memory_space<smem>>) -> (i32, i32) {
    %0 = arith.index_cast %arg0 : i32 to index
    %1 = memref.load %arg1[%0] : memref<1xi32, #tpu.memory_space<smem>>
    %c0_i32 = arith.constant 0 : i32
    %c0_i32_0 = arith.constant 0 : i32
    return %1, %c0_i32 : i32, i32
  }
  func.func @transform_2(%arg0: i32, %arg1: memref<1xi32, #tpu.memory_space<smem>>) -> (i32, i32) {
    %c0_i32 = arith.constant 0 : i32
    %c0_i32_0 = arith.constant 0 : i32
    %c0_i32_1 = arith.constant 0 : i32
    return %c0_i32, %c0_i32_0 : i32, i32
  }
  func.func @transform_3(%arg0: i32, %arg1: memref<1xi32, #tpu.memory_space<smem>>) -> (i32, i32) {
    %c0_i32 = arith.constant 0 : i32
    %c0_i32_0 = arith.constant 0 : i32
    %c0_i32_1 = arith.constant 0 : i32
    return %c0_i32, %c0_i32_0 : i32, i32
  }
  func.func @transform_4(%arg0: i32, %arg1: memref<1xi32, #tpu.memory_space<smem>>) -> (i32, i32) {
    %c0_i32 = arith.constant 0 : i32
    %c0_i32_0 = arith.constant 0 : i32
    return %arg0, %c0_i32 : i32, i32
  }
}

module attributes {stable_mosaic.version = 11 : i64} {
  func.func @encoder_stage2_kernel(%arg0: i32, %arg1: memref<1xi32, #tpu.memory_space<smem>>, %arg2: memref<128x128xbf16, #tpu.memory_space<vmem>>, %arg3: memref<128x64xbf16, #tpu.memory_space<vmem>>, %arg4: memref<2x128xbf16, #tpu.memory_space<vmem>>, %arg5: memref<64x128xf32, #tpu.memory_space<vmem>>, %arg6: memref<3x128xf32, #tpu.memory_space<vmem>>, %arg7: memref<1x2x128xf32, #tpu.memory_space<vmem>>) attributes {dimension_semantics = [#tpu.dimension_semantics<parallel>], iteration_bounds = array<i64: 1>, scalar_prefetch = 1 : i64, scratch_operands = 0 : i64, tpu.core_type = #tpu.core_type<tc>, window_params = [{transform_indices = @transform_0, window_bounds = array<i64: 128, 128>}, {transform_indices = @transform_1, window_bounds = array<i64: 128, 64>}, {transform_indices = @transform_2, window_bounds = array<i64: 2, 128>}, {pipeline_mode = #tpu.pipeline_mode<synchronous>, transform_indices = @transform_3, window_bounds = array<i64: 64, 128>}, {pipeline_mode = #tpu.pipeline_mode<synchronous>, transform_indices = @transform_4, window_bounds = array<i64: 3, 128>}, {transform_indices = @transform_5, window_bounds = array<i64: 1, 2, 128>}]} {
    %c0 = arith.constant 0 : index
    %c0_0 = arith.constant 0 : index
    %0 = vector.load %arg6[%c0, %c0_0] : memref<3x128xf32, #tpu.memory_space<vmem>>, vector<3x128xf32>
    %1 = vector.extract_strided_slice %0 {offsets = [0, 0], sizes = [1, 64], strides = [1, 1]} : vector<3x128xf32> to vector<1x64xf32>
    %2 = vector.extract_strided_slice %0 {offsets = [0, 64], sizes = [1, 1], strides = [1, 1]} : vector<3x128xf32> to vector<1x1xf32>
    %3 = vector.extract_strided_slice %0 {offsets = [1, 0], sizes = [1, 128], strides = [1, 1]} : vector<3x128xf32> to vector<1x128xf32>
    %4 = vector.extract_strided_slice %0 {offsets = [2, 0], sizes = [1, 128], strides = [1, 1]} : vector<3x128xf32> to vector<1x128xf32>
    %c0_1 = arith.constant 0 : index
    %c0_2 = arith.constant 0 : index
    %5 = vector.load %arg2[%c0_1, %c0_2] : memref<128x128xbf16, #tpu.memory_space<vmem>>, vector<128x128xbf16>
    %c0_3 = arith.constant 0 : index
    %c0_4 = arith.constant 0 : index
    %6 = vector.load %arg3[%c0_3, %c0_4] : memref<128x64xbf16, #tpu.memory_space<vmem>>, vector<128x64xbf16>
    %cst = arith.constant dense<0.000000e+00> : vector<128x64xf32>
    %7 = tpu.matmul %5, %6, %cst {dimension_numbers = #tpu.dot_dimension_numbers<[1], [0], [0], [1], [0, 0, 1, 1], [], []>} : vector<128x128xbf16>, vector<128x64xbf16>, vector<128x64xf32> -> vector<128x64xf32>
    %8 = vector.broadcast %1 : vector<1x64xf32> to vector<128x64xf32>
    %9 = arith.addf %7, %8 : vector<128x64xf32>
    %cst_5 = arith.constant 0.000000e+00 : f32
    %10 = vector.broadcast %cst_5 : f32 to vector<128x64xf32>
    %11 = arith.maximumf %9, %10 : vector<128x64xf32>
    %c0_6 = arith.constant 0 : index
    %c0_7 = arith.constant 0 : index
    %12 = vector.load %arg5[%c0_6, %c0_7] : memref<64x128xf32, #tpu.memory_space<vmem>>, vector<64x128xf32>
    %cst_8 = arith.constant dense<0.000000e+00> : vector<128x128xf32>
    %13 = tpu.matmul %11, %12, %cst_8 {dimension_numbers = #tpu.dot_dimension_numbers<[1], [0], [0], [1], [0, 0, 1, 1], [], []>} : vector<128x64xf32>, vector<64x128xf32>, vector<128x128xf32> -> vector<128x128xf32>
    %14 = vector.broadcast %3 : vector<1x128xf32> to vector<128x128xf32>
    %15 = arith.addf %13, %14 : vector<128x128xf32>
    %cst_9 = arith.constant 0.000000e+00 : f32
    %16 = vector.broadcast %cst_9 : f32 to vector<128x128xf32>
    %17 = arith.maximumf %15, %16 : vector<128x128xf32>
    %18 = vector.broadcast %4 : vector<1x128xf32> to vector<128x128xf32>
    %19 = arith.mulf %17, %18 : vector<128x128xf32>
    %cst_10 = arith.constant dense<0.000000e+00> : vector<128xf32>
    %20 = vector.multi_reduction <add>, %19, %cst_10 [1] : vector<128x128xf32> to vector<128xf32>
    %21 = vector.shape_cast %20 : vector<128xf32> to vector<128x1xf32>
    %22 = vector.broadcast %2 : vector<1x1xf32> to vector<128x1xf32>
    %23 = arith.addf %21, %22 : vector<128x1xf32>
    %24 = vector.broadcast %23 : vector<128x1xf32> to vector<128x128xf32>
    %25 = arith.mulf %17, %24 : vector<128x128xf32>
    %26 = arith.truncf %25 : vector<128x128xf32> to vector<128x128xbf16>
    %c0_11 = arith.constant 0 : index
    %c0_12 = arith.constant 0 : index
    %27 = vector.load %arg4[%c0_11, %c0_12] : memref<2x128xbf16, #tpu.memory_space<vmem>>, vector<2x128xbf16>
    %cst_13 = arith.constant dense<0.000000e+00> : vector<2x128xf32>
    %28 = tpu.matmul %27, %26, %cst_13 {dimension_numbers = #tpu.dot_dimension_numbers<[1], [0], [0], [1], [0, 0, 1, 1], [], []>} : vector<2x128xbf16>, vector<128x128xbf16>, vector<2x128xf32> -> vector<2x128xf32>
    %c0_14 = arith.constant 0 : index
    %c0_15 = arith.constant 0 : index
    %c0_16 = arith.constant 0 : index
    %29 = vector.load %arg7[%c0_14, %c0_15, %c0_16] : memref<1x2x128xf32, #tpu.memory_space<vmem>>, vector<1x2x128xf32>
    %30 = vector.shape_cast %29 : vector<1x2x128xf32> to vector<2x128xf32>
    %31 = vector.shape_cast %28 : vector<2x128xf32> to vector<1x2x128xf32>
    tpu.vector_store %arg7[%c0_14, %c0_15, %c0_16], %31 {strides = array<i32>} : memref<1x2x128xf32, #tpu.memory_space<vmem>>, vector<1x2x128xf32>,
    return
  }
  func.func @transform_0(%arg0: i32, %arg1: memref<1xi32, #tpu.memory_space<smem>>) -> (i32, i32) {
    %0 = arith.index_cast %arg0 : i32 to index
    %1 = memref.load %arg1[%0] : memref<1xi32, #tpu.memory_space<smem>>
    %c0_i32 = arith.constant 0 : i32
    return %arg0, %1 : i32, i32
  }
  func.func @transform_1(%arg0: i32, %arg1: memref<1xi32, #tpu.memory_space<smem>>) -> (i32, i32) {
    %0 = arith.index_cast %arg0 : i32 to index
    %1 = memref.load %arg1[%0] : memref<1xi32, #tpu.memory_space<smem>>
    %c0_i32 = arith.constant 0 : i32
    %c0_i32_0 = arith.constant 0 : i32
    return %1, %c0_i32 : i32, i32
  }
  func.func @transform_2(%arg0: i32, %arg1: memref<1xi32, #tpu.memory_space<smem>>) -> (i32, i32) {
    %c0_i32 = arith.constant 0 : i32
    %c0_i32_0 = arith.constant 0 : i32
    return %c0_i32, %arg0 : i32, i32
  }
  func.func @transform_3(%arg0: i32, %arg1: memref<1xi32, #tpu.memory_space<smem>>) -> (i32, i32) {
    %c0_i32 = arith.constant 0 : i32
    %c0_i32_0 = arith.constant 0 : i32
    %c0_i32_1 = arith.constant 0 : i32
    return %c0_i32, %c0_i32_0 : i32, i32
  }
  func.func @transform_4(%arg0: i32, %arg1: memref<1xi32, #tpu.memory_space<smem>>) -> (i32, i32) {
    %c0_i32 = arith.constant 0 : i32
    %c0_i32_0 = arith.constant 0 : i32
    %c0_i32_1 = arith.constant 0 : i32
    return %c0_i32, %c0_i32_0 : i32, i32
  }
  func.func @transform_5(%arg0: i32, %arg1: memref<1xi32, #tpu.memory_space<smem>>) -> (i32, i32, i32) {
    %c0_i32 = arith.constant 0 : i32
    %c0_i32_0 = arith.constant 0 : i32
    %c0_i32_1 = arith.constant 0 : i32
    return %arg0, %c0_i32, %c0_i32_0 : i32, i32, i32
  }
}

</mosaic_0001>

<llo_original>
// kernel: mul.15
$region0: #{mul.15}
  #allocation0 [shape = 's32[1]{0}', space=sflag, size = 0x4, scoped, tag = 'scoped memory for mul.15']
  %s0 = inlined_call_operand.vmem [shape: f32[48], index: 0, kind: input, shape index: {}]
  %s1 = inlined_call_operand.vmem [shape: f32[48], index: 1, kind: input, shape index: {}]
  %s2 = inlined_call_operand.vmem [shape: f32[48], index: 2, kind: output, shape index: {}]
  %v3 = vld [vmem:[%s0] sm:$0x1]
  %v4 = vld [vmem:[%s1] sm:$0x1]
  %5 = xla_tuple %v3, %v4
  %6 = xla_tuple %5
  %v7 = vmul.f32 %v3, %v4
  %8 = xla_tuple %v7
  %9 = vst [vmem:[%s2] sm:$0x1] %v7

// kernel: _encoder_forward_padded.2
$region0: #{_encoder_forward_padded.2}
  #allocation0 [shape = 'u32[]', space=smem, size = 0x4, offset = 0x4, fixed_abs, tag = 'smem constant byte address 0x4 - core index']
  #allocation1 [shape = 'u32[144,128]{1,0:T(1,128)}', space=vmem, size = 0x12000, scoped, tag = 'internal scratch']
  #allocation2 [shape = 's32[1]{0}', space=sflag, size = 0x4, scoped, tag = 'scoped memory for _encoder_forward_padded.2']
  #allocation3 [shape = 's32[1]{0:T(128)S(6)}', space=smem, size = 0x200, scoped, tag = 'prefetched SMEM operand 0']
  %s0 = inlined_call_operand.<no memory space> [shape: s32[1], index: 0, kind: input, shape index: {}]
  %s1 = inlined_call_operand.vmem [shape: bf16[128,128], index: 1, kind: input, shape index: {}]
  %s2 = inlined_call_operand.vmem [shape: bf16[128,32], index: 2, kind: input, shape index: {}]
  %s3 = inlined_call_operand.vmem [shape: f32[32,64], index: 3, kind: input, shape index: {}]
  %s4 = inlined_call_operand.vmem [shape: f32[1,128], index: 4, kind: input, shape index: {}]
  %s5 = inlined_call_operand.vmem [shape: bf16[128,64], index: 5, kind: output, shape index: {}]
  %s6 = sld [smem:[#allocation0]]
  $region26: #{_encoder_forward_padded.2} parent=0
    _
  %s8 = ssub.s32 1, %s6
  %s9 = scalar_select 0, %s8, %s6
  %10 = sst [smem:[#allocation3]] %s0
  // Predicated region
  $region2: #{_encoder_forward_padded.2} parent=0 // pred_check
    _
  $region3: #{_encoder_forward_padded.2} parent=0 // pred_check_branch
    %12 = sbr.rel (0) target = $region5
  $region4: #{_encoder_forward_padded.2} parent=0 // pred_region
    %s13 = sld [smem:[#allocation3]]
    %p14 = scmp.lt.s32.totalorder %s13, 0
    %s15 = scalar_select %p14, %s13, 0
    %s16 = smul.addr %s15, 4
    %s17 = scalar_lea.vmem %s1, %s16
    %s18 = sld [smem:[#allocation3]]
  $region5: #{_encoder_forward_padded.2} parent=0 // pred_fallthru
    _
  // Predicated region
  $region6: #{_encoder_forward_padded.2} parent=0 // pred_check
    _
  $region7: #{_encoder_forward_padded.2} parent=0 // pred_check_branch
    %20 = sbr.rel (0) target = $region9
  $region8: #{_encoder_forward_padded.2} parent=0 // pred_region
    %s21 = sld [smem:[#allocation3]]
    %s22 = smul.u32 16, %s21
    %p23 = scmp.lt.s32.totalorder %s22, 15
    %s24 = scalar_select %p23, %s22, 15
    %s25 = smul.addr %s24, 4
    %s26 = scalar_lea.vmem %s2, %s25
    %s27 = sld [smem:[#allocation3]]
    %s28 = smul.u32 16, %s27
  $region9: #{_encoder_forward_padded.2} parent=0 // pred_fallthru
    _
  // Predicated region
  $region10: #{_encoder_forward_padded.2} parent=0 // pred_check
    _
  $region11: #{_encoder_forward_padded.2} parent=0 // pred_check_branch
    %30 = sbr.rel (0) target = $region13
  $region12: #{_encoder_forward_padded.2} parent=0 // pred_region
    _
  $region13: #{_encoder_forward_padded.2} parent=0 // pred_fallthru
    _
  // Predicated region
  $region14: #{_encoder_forward_padded.2} parent=0 // pred_check
    _
  $region15: #{_encoder_forward_padded.2} parent=0 // pred_check_branch
    %32 = sbr.rel (0) target = $region17
  $region16: #{_encoder_forward_padded.2} parent=0 // pred_region
    _
  $region17: #{_encoder_forward_padded.2} parent=0 // pred_fallthru
    _
  %s33 = sld [smem:[#allocation3]]
  %p34 = scmp.lt.s32.totalorder %s33, 0
  %s35 = scalar_select %p34, %s33, 0
  %s36 = smul.addr %s35, 4
  %s37 = scalar_lea.vmem %s1, %s36
  %s38 = sld [smem:[#allocation3]]
  %s39 = smul.u32 16, %s38
  %p40 = scmp.lt.s32.totalorder %s39, 15
  %s41 = scalar_select %p40, %s39, 15
  %s42 = smul.addr %s41, 4
  %s43 = scalar_lea.vmem %s2, %s42
  %s44 = sld [smem:[#allocation3]]
  %p45 = scmp.lt.s32.totalorder %s44, 0
  %s46 = scalar_select %p45, %s44, 0
  %s47 = smul.addr %s46, 4
  %s48 = scalar_lea.vmem %s1, %s47
  %s49 = sld [smem:[#allocation3]]
  %s50 = sld [smem:[#allocation3]]
  %s51 = smul.u32 16, %s50
  %p52 = scmp.lt.s32.totalorder %s51, 15
  %s53 = scalar_select %p52, %s51, 15
  %s54 = smul.addr %s53, 4
  %s55 = scalar_lea.vmem %s2, %s54
  %s56 = sld [smem:[#allocation3]]
  %s57 = smul.u32 16, %s56
  %v59 = vld [vmem:[%s4] sm:$0x1]
  %v60 = vld [vmem:[%s48] sm:$0xf]
  %v61 = vld [vmem:[%s48 + $0x4] sm:$0xf]
  %v62 = vld [vmem:[%s48 + $0x8] sm:$0xf]
  %v63 = vld [vmem:[%s48 + $0xc] sm:$0xf]
  %v64 = vld [vmem:[%s48 + $0x10] sm:$0xf]
  %v65 = vld [vmem:[%s48 + $0x14] sm:$0xf]
  %v66 = vld [vmem:[%s48 + $0x18] sm:$0xf]
  %v67 = vld [vmem:[%s48 + $0x1c] sm:$0xf]
  %v68 = vld [vmem:[%s48 + $0x20] sm:$0xf]
  %v69 = vld [vmem:[%s48 + $0x24] sm:$0xf]
  %v70 = vld [vmem:[%s48 + $0x28] sm:$0xf]
  %v71 = vld [vmem:[%s48 + $0x2c] sm:$0xf]
  %v72 = vld [vmem:[%s48 + $0x30] sm:$0xf]
  %v73 = vld [vmem:[%s48 + $0x34] sm:$0xf]
  %v74 = vld [vmem:[%s48 + $0x38] sm:$0xf]
  %v75 = vld [vmem:[%s48 + $0x3c] sm:$0xf]
  %v76 = vld [vmem:[%s55] sm:$0xf]
  %v77 = vld [vmem:[%s55 + $0x4] sm:$0xf]
  %v78 = vld [vmem:[%s55 + $0x8] sm:$0xf]
  %v79 = vld [vmem:[%s55 + $0xc] sm:$0xf]
  %v80 = vld [vmem:[%s55 + $0x10] sm:$0xf]
  %v81 = vld [vmem:[%s55 + $0x14] sm:$0xf]
  %v82 = vld [vmem:[%s55 + $0x18] sm:$0xf]
  %v83 = vld [vmem:[%s55 + $0x1c] sm:$0xf]
  %v84 = vld [vmem:[%s55 + $0x20] sm:$0xf]
  %v85 = vld [vmem:[%s55 + $0x24] sm:$0xf]
  %v86 = vld [vmem:[%s55 + $0x28] sm:$0xf]
  %v87 = vld [vmem:[%s55 + $0x2c] sm:$0xf]
  %v88 = vld [vmem:[%s55 + $0x30] sm:$0xf]
  %v89 = vld [vmem:[%s55 + $0x34] sm:$0xf]
  %v90 = vld [vmem:[%s55 + $0x38] sm:$0xf]
  %v91 = vld [vmem:[%s55 + $0x3c] sm:$0xf]
  %v93 = vlaneseq
  %v94 = vshrl.u32 %v93, 7
  %v95 = vsub.s32 0, %v94
  %v96 = vrot.slane %v59, %v95
  %v114 = vunpack.c.l.b16 %v60
  %v115 = vunpack.c.l.b16 %v61
  %v116 = vunpack.c.l.b16 %v62
  %v117 = vunpack.c.l.b16 %v63
  %v118 = vunpack.c.l.b16 %v64
  %v119 = vunpack.c.l.b16 %v65
  %v120 = vunpack.c.l.b16 %v66
  %v121 = vunpack.c.l.b16 %v67
  %v122 = vunpack.c.l.b16 %v68
  %v123 = vunpack.c.l.b16 %v69
  %v124 = vunpack.c.l.b16 %v70
  %v125 = vunpack.c.l.b16 %v71
  %v126 = vunpack.c.l.b16 %v72
  %v127 = vunpack.c.l.b16 %v73
  %v128 = vunpack.c.l.b16 %v74
  %v129 = vunpack.c.l.b16 %v75
  %v130 = vpack.c.b16 %v115, %v114
  %v131 = vpack.c.b16 %v117, %v116
  %v132 = vpack.c.b16 %v119, %v118
  %v133 = vpack.c.b16 %v121, %v120
  %v134 = vpack.c.b16 %v123, %v122
  %v135 = vpack.c.b16 %v125, %v124
  %v136 = vpack.c.b16 %v127, %v126
  %v137 = vpack.c.b16 %v129, %v128
  %v162 = vunpack.c.l.b16 %v76
  %v163 = vunpack.c.l.b16 %v77
  %v164 = vunpack.c.l.b16 %v78
  %v165 = vunpack.c.l.b16 %v79
  %v166 = vunpack.c.l.b16 %v80
  %v167 = vunpack.c.l.b16 %v81
  %v168 = vunpack.c.l.b16 %v82
  %v169 = vunpack.c.l.b16 %v83
  %v170 = vunpack.c.l.b16 %v84
  %v171 = vunpack.c.l.b16 %v85
  %v172 = vunpack.c.l.b16 %v86
  %v173 = vunpack.c.l.b16 %v87
  %v174 = vunpack.c.l.b16 %v88
  %v175 = vunpack.c.l.b16 %v89
  %v176 = vunpack.c.l.b16 %v90
  %v177 = vunpack.c.l.b16 %v91
  %v178 = vpack.c.b16 %v163, %v162
  %v179 = vpack.c.b16 %v165, %v164
  %v180 = vpack.c.b16 %v167, %v166
  %v181 = vpack.c.b16 %v169, %v168
  %v182 = vpack.c.b16 %v171, %v170
  %v183 = vpack.c.b16 %v173, %v172
  %v184 = vpack.c.b16 %v175, %v174
  %v185 = vpack.c.b16 %v177, %v176
  %194 = vmatprep.subr.bf16.mxu0 0
  %195 = vmatpush1.bf16.msra.mxu0 %v178
  %196 = vmatprep.subr.bf16.mxu0 0
  %197 = vmatpush1.bf16.msra.mxu0 %v179
  %198 = vmatprep.subr.bf16.mxu0 0
  %199 = vmatpush1.bf16.msra.mxu0 %v180
  %200 = vmatprep.subr.bf16.mxu0 0
  %201 = vmatpush1.bf16.msra.mxu0 %v181
  %202 = vmatprep.subr.bf16.mxu0 0
  %203 = vmatpush1.bf16.msra.mxu0 %v182
  %204 = vmatprep.subr.bf16.mxu0 0
  %205 = vmatpush1.bf16.msra.mxu0 %v183
  %206 = vmatprep.subr.bf16.mxu0 0
  %207 = vmatpush1.bf16.msra.mxu0 %v184
  %208 = vmatprep.subr.bf16.mxu0 0
  %209 = vmatpush1.bf16.msra.mxu0 %v185
  %210 = vmatprep.subr.bf16.mxu0 0
  %211 = vmatpush1.bf16.msra.mxu0 0
  %212 = vmatprep.subr.bf16.mxu0 0
  %213 = vmatpush1.bf16.msra.mxu0 0
  %214 = vmatprep.subr.bf16.mxu0 0
  %215 = vmatpush1.bf16.msra.mxu0 0
  %216 = vmatprep.subr.bf16.mxu0 0
  %217 = vmatpush1.bf16.msra.mxu0 0
  %218 = vmatprep.subr.bf16.mxu0 0
  %219 = vmatpush1.bf16.msra.mxu0 0
  %220 = vmatprep.subr.bf16.mxu0 0
  %221 = vmatpush1.bf16.msra.mxu0 0
  %222 = vmatprep.subr.bf16.mxu0 0
  %223 = vmatpush1.bf16.msra.mxu0 0
  %224 = vmatprep.subr.bf16.mxu0 0
  %225 = vmatpush1.bf16.msra.mxu0 0
  %226 = vmatprep.mubr.bf16.mxu0 0
  %227 = vmatmul.mubr.bf16.gmra.mrb[0].mxu0 %v130
  %v228 = vpop.f32.mrb[0].mxu0
  %v229 = vadd.f32 %v96, %v228
  %v230 = vpop.f32.mrb[0].mxu0
  %v231 = vpop.f32.mrb[0].mxu0
  %v232 = vadd.f32 %v96, %v231
  %v233 = vpop.f32.mrb[0].mxu0
  %234 = vmatprep.mubr.bf16.mxu0 0
  %235 = vmatmul.mubr.bf16.gmra.mrb[0].mxu0 %v131
  %v236 = vpop.f32.mrb[0].mxu0
  %v237 = vadd.f32 %v96, %v236
  %v238 = vpop.f32.mrb[0].mxu0
  %v239 = vpop.f32.mrb[0].mxu0
  %v240 = vadd.f32 %v96, %v239
  %v241 = vpop.f32.mrb[0].mxu0
  %242 = vmatprep.mubr.bf16.mxu0 0
  %243 = vmatmul.mubr.bf16.gmra.mrb[0].mxu0 %v132
  %v244 = vpop.f32.mrb[0].mxu0
  %v245 = vadd.f32 %v96, %v244
  %v246 = vpop.f32.mrb[0].mxu0
  %v247 = vpop.f32.mrb[0].mxu0
  %v248 = vadd.f32 %v96, %v247
  %v249 = vpop.f32.mrb[0].mxu0
  %250 = vmatprep.mubr.bf16.mxu0 0
  %251 = vmatmul.mubr.bf16.gmra.mrb[0].mxu0 %v133
  %v252 = vpop.f32.mrb[0].mxu0
  %v253 = vadd.f32 %v96, %v252
  %v254 = vpop.f32.mrb[0].mxu0
  %v255 = vpop.f32.mrb[0].mxu0
  %v256 = vadd.f32 %v96, %v255
  %v257 = vpop.f32.mrb[0].mxu0
  %258 = vmatprep.mubr.bf16.mxu0 0
  %259 = vmatmul.mubr.bf16.gmra.mrb[0].mxu0 %v134
  %v260 = vpop.f32.mrb[0].mxu0
  %v261 = vadd.f32 %v96, %v260
  %v262 = vpop.f32.mrb[0].mxu0
  %v263 = vpop.f32.mrb[0].mxu0
  %v264 = vadd.f32 %v96, %v263
  %v265 = vpop.f32.mrb[0].mxu0
  %266 = vmatprep.mubr.bf16.mxu0 0
  %267 = vmatmul.mubr.bf16.gmra.mrb[0].mxu0 %v135
  %v268 = vpop.f32.mrb[0].mxu0
  %v269 = vadd.f32 %v96, %v268
  %v270 = vpop.f32.mrb[0].mxu0
  %v271 = vpop.f32.mrb[0].mxu0
  %v272 = vadd.f32 %v96, %v271
  %v273 = vpop.f32.mrb[0].mxu0
  %274 = vmatprep.mubr.bf16.mxu0 0
  %275 = vmatmul.mubr.bf16.gmra.mrb[0].mxu0 %v136
  %v276 = vpop.f32.mrb[0].mxu0
  %v277 = vadd.f32 %v96, %v276
  %v278 = vpop.f32.mrb[0].mxu0
  %v279 = vpop.f32.mrb[0].mxu0
  %v280 = vadd.f32 %v96, %v279
  %v281 = vpop.f32.mrb[0].mxu0
  %282 = vmatprep.mubr.bf16.mxu0 0
  %283 = vmatmul.mubr.bf16.gmra.mrb[0].mxu0 %v137
  %v284 = vpop.f32.mrb[0].mxu0
  %v285 = vadd.f32 %v96, %v284
  %v286 = vpop.f32.mrb[0].mxu0
  %v287 = vpop.f32.mrb[0].mxu0
  %v288 = vadd.f32 %v96, %v287
  %v289 = vpop.f32.mrb[0].mxu0
  %290 = vdwg.mxu0
  %v291 = vmax.f32 %v229, 0.0
  %v292 = vmax.f32 %v232, 0.0
  %v293 = vmax.f32 %v237, 0.0
  %v294 = vmax.f32 %v240, 0.0
  %v295 = vmax.f32 %v245, 0.0
  %v296 = vmax.f32 %v248, 0.0
  %v297 = vmax.f32 %v253, 0.0
  %v298 = vmax.f32 %v256, 0.0
  %v299 = vmax.f32 %v261, 0.0
  %v300 = vmax.f32 %v264, 0.0
  %v301 = vmax.f32 %v269, 0.0
  %v302 = vmax.f32 %v272, 0.0
  %v303 = vmax.f32 %v277, 0.0
  %v304 = vmax.f32 %v280, 0.0
  %v305 = vmax.f32 %v285, 0.0
  %v306 = vmax.f32 %v288, 0.0
  %v307 = vld [vmem:[%s3] sm:$0xff]
  %v308 = vld [vmem:[%s3 + $0x8] sm:$0xff]
  %v309 = vld [vmem:[%s3 + $0x10] sm:$0xff]
  %v310 = vld [vmem:[%s3 + $0x18] sm:$0xff]
  %311 = vrot.lane.b32.xlu0 %v96, 96
  %v312 = vpop.permute.xlu0 %311
  %vm314 = vcmask 261120
  %v316 = vsel %vm314, %v291, 0
  %v319 = vsel %vm314, %v292, 0
  %v322 = vsel %vm314, %v293, 0
  %v325 = vsel %vm314, %v294, 0
  %v328 = vsel %vm314, %v295, 0
  %v331 = vsel %vm314, %v296, 0
  %v334 = vsel %vm314, %v297, 0
  %v337 = vsel %vm314, %v298, 0
  %v340 = vsel %vm314, %v299, 0
  %v343 = vsel %vm314, %v300, 0
  %v346 = vsel %vm314, %v301, 0
  %v349 = vsel %vm314, %v302, 0
  %v352 = vsel %vm314, %v303, 0
  %v355 = vsel %vm314, %v304, 0
  %v358 = vsel %vm314, %v305, 0
  %v361 = vsel %vm314, %v306, 0
  %363 = vmatprep.subr.mxu0 0.0
  %364 = vmatpush1.msra.mxu0 %v307
  %365 = vmatprep.subr.mxu0 0.0
  %366 = vmatpush1.msra.mxu0 %v308
  %367 = vmatprep.subr.mxu0 0.0
  %368 = vmatpush1.msra.mxu0 %v309
  %369 = vmatprep.subr.mxu0 0.0
  %370 = vmatpush1.msra.mxu0 %v310
  %371 = vmatprep.subr.mxu0 0.0
  %372 = vmatpush1.msra.mxu0 0.0
  %373 = vmatprep.subr.mxu0 0.0
  %374 = vmatpush1.msra.mxu0 0.0
  %375 = vmatprep.subr.mxu0 0.0
  %376 = vmatpush1.msra.mxu0 0.0
  %377 = vmatprep.subr.mxu0 0.0
  %378 = vmatpush1.msra.mxu0 0.0
  %379 = vmatprep.subr.mxu0 0.0
  %380 = vmatpush1.msra.mxu0 0.0
  %381 = vmatprep.subr.mxu0 0.0
  %382 = vmatpush1.msra.mxu0 0.0
  %383 = vmatprep.subr.mxu0 0.0
  %384 = vmatpush1.msra.mxu0 0.0
  %385 = vmatprep.subr.mxu0 0.0
  %386 = vmatpush1.msra.mxu0 0.0
  %387 = vmatprep.subr.mxu0 0.0
  %388 = vmatpush1.msra.mxu0 0.0
  %389 = vmatprep.subr.mxu0 0.0
  %390 = vmatpush1.msra.mxu0 0.0
  %391 = vmatprep.subr.mxu0 0.0
  %392 = vmatpush1.msra.mxu0 0.0
  %393 = vmatprep.subr.mxu0 0.0
  %394 = vmatpush1.msra.mxu0 0.0
  %395 = vmatprep.subr.mxu0 0.0
  %396 = vmatpush1.msra.mxu0 0.0
  %397 = vmatprep.subr.mxu0 0.0
  %398 = vmatpush1.msra.mxu0 0.0
  %399 = vmatprep.subr.mxu0 0.0
  %400 = vmatpush1.msra.mxu0 0.0
  %401 = vmatprep.subr.mxu0 0.0
  %402 = vmatpush1.msra.mxu0 0.0
  %403 = vmatprep.subr.mxu0 0.0
  %404 = vmatpush1.msra.mxu0 0.0
  %405 = vmatprep.subr.mxu0 0.0
  %406 = vmatpush1.msra.mxu0 0.0
  %407 = vmatprep.subr.mxu0 0.0
  %408 = vmatpush1.msra.mxu0 0.0
  %409 = vmatprep.subr.mxu0 0.0
  %410 = vmatpush1.msra.mxu0 0.0
  %411 = vmatprep.subr.mxu0 0.0
  %412 = vmatpush1.msra.mxu0 0.0
  %413 = vmatprep.subr.mxu0 0.0
  %414 = vmatpush1.msra.mxu0 0.0
  %415 = vmatprep.subr.mxu0 0.0
  %416 = vmatpush1.msra.mxu0 0.0
  %417 = vmatprep.subr.mxu0 0.0
  %418 = vmatpush1.msra.mxu0 0.0
  %419 = vmatprep.subr.mxu0 0.0
  %420 = vmatpush1.msra.mxu0 0.0
  %421 = vmatprep.subr.mxu0 0.0
  %422 = vmatpush1.msra.mxu0 0.0
  %423 = vmatprep.subr.mxu0 0.0
  %424 = vmatpush1.msra.mxu0 0.0
  %425 = vmatprep.subr.mxu0 0.0
  %426 = vmatpush1.msra.mxu0 0.0
  %427 = vmatprep.mubr.f32.mxu0 0.0
  %428 = vmatmul.mubr.f32.gmra.mrb[0].mxu0 %v316
  %v429 = vpop.f32.mrb[0].mxu0
  %v430 = vadd.f32 %v312, %v429
  %v431 = vpop.f32.mrb[0].mxu0
  %432 = vmatprep.mubr.f32.mxu0 0.0
  %433 = vmatmul.mubr.f32.gmra.mrb[0].mxu0 %v319
  %v434 = vpop.f32.mrb[0].mxu0
  %v435 = vadd.f32 %v312, %v434
  %v436 = vpop.f32.mrb[0].mxu0
  %437 = vmatprep.mubr.f32.mxu0 0.0
  %438 = vmatmul.mubr.f32.gmra.mrb[0].mxu0 %v322
  %v439 = vpop.f32.mrb[0].mxu0
  %v440 = vadd.f32 %v312, %v439
  %v441 = vpop.f32.mrb[0].mxu0
  %442 = vmatprep.mubr.f32.mxu0 0.0
  %443 = vmatmul.mubr.f32.gmra.mrb[0].mxu0 %v325
  %v444 = vpop.f32.mrb[0].mxu0
  %v445 = vadd.f32 %v312, %v444
  %v446 = vpop.f32.mrb[0].mxu0
  %447 = vmatprep.mubr.f32.mxu0 0.0
  %448 = vmatmul.mubr.f32.gmra.mrb[0].mxu0 %v328
  %v449 = vpop.f32.mrb[0].mxu0
  %v450 = vadd.f32 %v312, %v449
  %v451 = vpop.f32.mrb[0].mxu0
  %452 = vmatprep.mubr.f32.mxu0 0.0
  %453 = vmatmul.mubr.f32.gmra.mrb[0].mxu0 %v331
  %v454 = vpop.f32.mrb[0].mxu0
  %v455 = vadd.f32 %v312, %v454
  %v456 = vpop.f32.mrb[0].mxu0
  %457 = vmatprep.mubr.f32.mxu0 0.0
  %458 = vmatmul.mubr.f32.gmra.mrb[0].mxu0 %v334
  %v459 = vpop.f32.mrb[0].mxu0
  %v460 = vadd.f32 %v312, %v459
  %v461 = vpop.f32.mrb[0].mxu0
  %462 = vmatprep.mubr.f32.mxu0 0.0
  %463 = vmatmul.mubr.f32.gmra.mrb[0].mxu0 %v337
  %v464 = vpop.f32.mrb[0].mxu0
  %v465 = vadd.f32 %v312, %v464
  %v466 = vpop.f32.mrb[0].mxu0
  %467 = vmatprep.mubr.f32.mxu0 0.0
  %468 = vmatmul.mubr.f32.gmra.mrb[0].mxu0 %v340
  %v469 = vpop.f32.mrb[0].mxu0
  %v470 = vadd.f32 %v312, %v469
  %v471 = vpop.f32.mrb[0].mxu0
  %472 = vmatprep.mubr.f32.mxu0 0.0
  %473 = vmatmul.mubr.f32.gmra.mrb[0].mxu0 %v343
  %v474 = vpop.f32.mrb[0].mxu0
  %v475 = vadd.f32 %v312, %v474
  %v476 = vpop.f32.mrb[0].mxu0
  %477 = vmatprep.mubr.f32.mxu0 0.0
  %478 = vmatmul.mubr.f32.gmra.mrb[0].mxu0 %v346
  %v479 = vpop.f32.mrb[0].mxu0
  %v480 = vadd.f32 %v312, %v479
  %v481 = vpop.f32.mrb[0].mxu0
  %482 = vmatprep.mubr.f32.mxu0 0.0
  %483 = vmatmul.mubr.f32.gmra.mrb[0].mxu0 %v349
  %v484 = vpop.f32.mrb[0].mxu0
  %v485 = vadd.f32 %v312, %v484
  %v486 = vpop.f32.mrb[0].mxu0
  %487 = vmatprep.mubr.f32.mxu0 0.0
  %488 = vmatmul.mubr.f32.gmra.mrb[0].mxu0 %v352
  %v489 = vpop.f32.mrb[0].mxu0
  %v490 = vadd.f32 %v312, %v489
  %v491 = vpop.f32.mrb[0].mxu0
  %492 = vmatprep.mubr.f32.mxu0 0.0
  %493 = vmatmul.mubr.f32.gmra.mrb[0].mxu0 %v355
  %v494 = vpop.f32.mrb[0].mxu0
  %v495 = vadd.f32 %v312, %v494
  %v496 = vpop.f32.mrb[0].mxu0
  %497 = vmatprep.mubr.f32.mxu0 0.0
  %498 = vmatmul.mubr.f32.gmra.mrb[0].mxu0 %v358
  %v499 = vpop.f32.mrb[0].mxu0
  %v500 = vadd.f32 %v312, %v499
  %v501 = vpop.f32.mrb[0].mxu0
  %502 = vmatprep.mubr.f32.mxu0 0.0
  %503 = vmatmul.mubr.f32.gmra.mrb[0].mxu0 %v361
  %v504 = vpop.f32.mrb[0].mxu0
  %v505 = vadd.f32 %v312, %v504
  %v506 = vpop.f32.mrb[0].mxu0
  %507 = vdwg.mxu0
  %v508 = vpack.c.bf16 %v435, %v430
  %v509 = vpack.c.bf16 %v445, %v440
  %v510 = vpack.c.bf16 %v455, %v450
  %v511 = vpack.c.bf16 %v465, %v460
  %v512 = vpack.c.bf16 %v475, %v470
  %v513 = vpack.c.bf16 %v485, %v480
  %v514 = vpack.c.bf16 %v495, %v490
  %v515 = vpack.c.bf16 %v505, %v500
  %v524 = vunpack.c.l.b16 %v508
  %v525 = vunpack.c.h.b16 %v508
  %v526 = vunpack.c.l.b16 %v509
  %v527 = vunpack.c.h.b16 %v509
  %v528 = vunpack.c.l.b16 %v510
  %v529 = vunpack.c.h.b16 %v510
  %v530 = vunpack.c.l.b16 %v511
  %v531 = vunpack.c.h.b16 %v511
  %v532 = vunpack.c.l.b16 %v512
  %v533 = vunpack.c.h.b16 %v512
  %v534 = vunpack.c.l.b16 %v513
  %v535 = vunpack.c.h.b16 %v513
  %v536 = vunpack.c.l.b16 %v514
  %v537 = vunpack.c.h.b16 %v514
  %v538 = vunpack.c.l.b16 %v515
  %v539 = vunpack.c.h.b16 %v515
  %v540 = vpack.c.b16 %v524, %v524
  %v541 = vpack.c.b16 %v525, %v525
  %v542 = vpack.c.b16 %v526, %v526
  %v543 = vpack.c.b16 %v527, %v527
  %v544 = vpack.c.b16 %v528, %v528
  %v545 = vpack.c.b16 %v529, %v529
  %v546 = vpack.c.b16 %v530, %v530
  %v547 = vpack.c.b16 %v531, %v531
  %v548 = vpack.c.b16 %v532, %v532
  %v549 = vpack.c.b16 %v533, %v533
  %v550 = vpack.c.b16 %v534, %v534
  %v551 = vpack.c.b16 %v535, %v535
  %v552 = vpack.c.b16 %v536, %v536
  %v553 = vpack.c.b16 %v537, %v537
  %v554 = vpack.c.b16 %v538, %v538
  %v555 = vpack.c.b16 %v539, %v539
  %vm572 = vcmask 519168
  %573 = vst.msk [vmem:[%s5] sm:$0xf] %vm572, %v540
  %574 = vst.msk [vmem:[%s5 + $0x4] sm:$0xf] %vm572, %v541
  %575 = vst.msk [vmem:[%s5 + $0x8] sm:$0xf] %vm572, %v542
  %576 = vst.msk [vmem:[%s5 + $0xc] sm:$0xf] %vm572, %v543
  %577 = vst.msk [vmem:[%s5 + $0x10] sm:$0xf] %vm572, %v544
  %578 = vst.msk [vmem:[%s5 + $0x14] sm:$0xf] %vm572, %v545
  %579 = vst.msk [vmem:[%s5 + $0x18] sm:$0xf] %vm572, %v546
  %580 = vst.msk [vmem:[%s5 + $0x1c] sm:$0xf] %vm572, %v547
  %581 = vst.msk [vmem:[%s5 + $0x20] sm:$0xf] %vm572, %v548
  %582 = vst.msk [vmem:[%s5 + $0x24] sm:$0xf] %vm572, %v549
  %583 = vst.msk [vmem:[%s5 + $0x28] sm:$0xf] %vm572, %v550
  %584 = vst.msk [vmem:[%s5 + $0x2c] sm:$0xf] %vm572, %v551
  %585 = vst.msk [vmem:[%s5 + $0x30] sm:$0xf] %vm572, %v552
  %586 = vst.msk [vmem:[%s5 + $0x34] sm:$0xf] %vm572, %v553
  %587 = vst.msk [vmem:[%s5 + $0x38] sm:$0xf] %vm572, %v554
  %588 = vst.msk [vmem:[%s5 + $0x3c] sm:$0xf] %vm572, %v555
  // Predicated region
  $region18: #{_encoder_forward_padded.2} parent=0 // pred_check
    _
  $region19: #{_encoder_forward_padded.2} parent=0 // pred_check_branch
    %590 = sbr.rel (0) target = $region21
  $region20: #{_encoder_forward_padded.2} parent=0 // pred_region
    _
  $region21: #{_encoder_forward_padded.2} parent=0 // pred_fallthru
    _
  // Predicated region
  $region22: #{_encoder_forward_padded.2} parent=0 // pred_check
    _
  $region23: #{_encoder_forward_padded.2} parent=0 // pred_check_branch
    %592 = sbr.rel (0) target = $region25
  $region24: #{_encoder_forward_padded.2} parent=0 // pred_region
    _
  $region25: #{_encoder_forward_padded.2} parent=0 // pred_fallthru
    _

// kernel: _encoder_forward_padded.3
$region0: #{_encoder_forward_padded.3}
  #allocation0 [shape = 'u32[]', space=smem, size = 0x4, offset = 0x4, fixed_abs, tag = 'smem constant byte address 0x4 - core index']
  #allocation1 [shape = 'u32[144,128]{1,0:T(1,128)}', space=vmem, size = 0x12000, scoped, tag = 'internal scratch']
  #allocation2 [shape = 's32[1]{0}', space=sflag, size = 0x4, scoped, tag = 'scoped memory for _encoder_forward_padded.3']
  #allocation3 [shape = 's32[1]{0:T(128)S(6)}', space=smem, size = 0x200, scoped, tag = 'prefetched SMEM operand 0']
  %s0 = inlined_call_operand.<no memory space> [shape: s32[1], index: 0, kind: input, shape index: {}]
  %s1 = inlined_call_operand.vmem [shape: bf16[128,128], index: 1, kind: input, shape index: {}]
  %s2 = inlined_call_operand.vmem [shape: bf16[128,64], index: 2, kind: input, shape index: {}]
  %s3 = inlined_call_operand.vmem [shape: bf16[2,128], index: 3, kind: input, shape index: {}]
  %s4 = inlined_call_operand.vmem [shape: f32[64,128], index: 4, kind: input, shape index: {}]
  %s5 = inlined_call_operand.vmem [shape: f32[3,128], index: 5, kind: input, shape index: {}]
  %s6 = inlined_call_operand.vmem [shape: f32[1,2,128], index: 6, kind: output, shape index: {}]
  %s7 = sld [smem:[#allocation0]]
  $region30: #{_encoder_forward_padded.3} parent=0
    _
  %s9 = ssub.s32 1, %s7
  %s10 = scalar_select 0, %s9, %s7
  %11 = sst [smem:[#allocation3]] %s0
  // Predicated region
  $region2: #{_encoder_forward_padded.3} parent=0 // pred_check
    _
  $region3: #{_encoder_forward_padded.3} parent=0 // pred_check_branch
    %13 = sbr.rel (0) target = $region5
  $region4: #{_encoder_forward_padded.3} parent=0 // pred_region
    %s14 = sld [smem:[#allocation3]]
    %p15 = scmp.lt.s32.totalorder %s14, 0
    %s16 = scalar_select %p15, %s14, 0
    %s17 = smul.addr %s16, 4
    %s18 = scalar_lea.vmem %s1, %s17
    %s19 = sld [smem:[#allocation3]]
  $region5: #{_encoder_forward_padded.3} parent=0 // pred_fallthru
    _
  // Predicated region
  $region6: #{_encoder_forward_padded.3} parent=0 // pred_check
    _
  $region7: #{_encoder_forward_padded.3} parent=0 // pred_check_branch
    %21 = sbr.rel (0) target = $region9
  $region8: #{_encoder_forward_padded.3} parent=0 // pred_region
    %s22 = sld [smem:[#allocation3]]
    %s23 = smul.u32 16, %s22
    %p24 = scmp.lt.s32.totalorder %s23, 15
    %s25 = scalar_select %p24, %s23, 15
    %s26 = smul.addr %s25, 4
    %s27 = scalar_lea.vmem %s2, %s26
    %s28 = sld [smem:[#allocation3]]
    %s29 = smul.u32 16, %s28
  $region9: #{_encoder_forward_padded.3} parent=0 // pred_fallthru
    _
  // Predicated region
  $region10: #{_encoder_forward_padded.3} parent=0 // pred_check
    _
  $region11: #{_encoder_forward_padded.3} parent=0 // pred_check_branch
    %31 = sbr.rel (0) target = $region13
  $region12: #{_encoder_forward_padded.3} parent=0 // pred_region
    _
  $region13: #{_encoder_forward_padded.3} parent=0 // pred_fallthru
    _
  // Predicated region
  $region14: #{_encoder_forward_padded.3} parent=0 // pred_check
    _
  $region15: #{_encoder_forward_padded.3} parent=0 // pred_check_branch
    %33 = sbr.rel (0) target = $region17
  $region16: #{_encoder_forward_padded.3} parent=0 // pred_region
    _
  $region17: #{_encoder_forward_padded.3} parent=0 // pred_fallthru
    _
  // Predicated region
  $region18: #{_encoder_forward_padded.3} parent=0 // pred_check
    _
  $region19: #{_encoder_forward_padded.3} parent=0 // pred_check_branch
    %35 = sbr.rel (0) target = $region21
  $region20: #{_encoder_forward_padded.3} parent=0 // pred_region
    _
  $region21: #{_encoder_forward_padded.3} parent=0 // pred_fallthru
    _
  %s36 = sld [smem:[#allocation3]]
  %p37 = scmp.lt.s32.totalorder %s36, 0
  %s38 = scalar_select %p37, %s36, 0
  %s39 = smul.addr %s38, 4
  %s40 = scalar_lea.vmem %s1, %s39
  %s41 = sld [smem:[#allocation3]]
  %s42 = smul.u32 16, %s41
  %p43 = scmp.lt.s32.totalorder %s42, 15
  %s44 = scalar_select %p43, %s42, 15
  %s45 = smul.addr %s44, 4
  %s46 = scalar_lea.vmem %s2, %s45
  %s47 = sld [smem:[#allocation3]]
  %p48 = scmp.lt.s32.totalorder %s47, 0
  %s49 = scalar_select %p48, %s47, 0
  %s50 = smul.addr %s49, 4
  %s51 = scalar_lea.vmem %s1, %s50
  %s52 = sld [smem:[#allocation3]]
  %s53 = sld [smem:[#allocation3]]
  %s54 = smul.u32 16, %s53
  %p55 = scmp.lt.s32.totalorder %s54, 15
  %s56 = scalar_select %p55, %s54, 15
  %s57 = smul.addr %s56, 4
  %s58 = scalar_lea.vmem %s2, %s57
  %s59 = sld [smem:[#allocation3]]
  %s60 = smul.u32 16, %s59
  %v62 = vld [vmem:[%s5] sm:$0x7]
  %v63 = vld [vmem:[%s51] sm:$0xf]
  %v64 = vld [vmem:[%s51 + $0x4] sm:$0xf]
  %v65 = vld [vmem:[%s51 + $0x8] sm:$0xf]
  %v66 = vld [vmem:[%s51 + $0xc] sm:$0xf]
  %v67 = vld [vmem:[%s51 + $0x10] sm:$0xf]
  %v68 = vld [vmem:[%s51 + $0x14] sm:$0xf]
  %v69 = vld [vmem:[%s51 + $0x18] sm:$0xf]
  %v70 = vld [vmem:[%s51 + $0x1c] sm:$0xf]
  %v71 = vld [vmem:[%s51 + $0x20] sm:$0xf]
  %v72 = vld [vmem:[%s51 + $0x24] sm:$0xf]
  %v73 = vld [vmem:[%s51 + $0x28] sm:$0xf]
  %v74 = vld [vmem:[%s51 + $0x2c] sm:$0xf]
  %v75 = vld [vmem:[%s51 + $0x30] sm:$0xf]
  %v76 = vld [vmem:[%s51 + $0x34] sm:$0xf]
  %v77 = vld [vmem:[%s51 + $0x38] sm:$0xf]
  %v78 = vld [vmem:[%s51 + $0x3c] sm:$0xf]
  %v79 = vld [vmem:[%s58] sm:$0xf]
  %v80 = vld [vmem:[%s58 + $0x4] sm:$0xf]
  %v81 = vld [vmem:[%s58 + $0x8] sm:$0xf]
  %v82 = vld [vmem:[%s58 + $0xc] sm:$0xf]
  %v83 = vld [vmem:[%s58 + $0x10] sm:$0xf]
  %v84 = vld [vmem:[%s58 + $0x14] sm:$0xf]
  %v85 = vld [vmem:[%s58 + $0x18] sm:$0xf]
  %v86 = vld [vmem:[%s58 + $0x1c] sm:$0xf]
  %v87 = vld [vmem:[%s58 + $0x20] sm:$0xf]
  %v88 = vld [vmem:[%s58 + $0x24] sm:$0xf]
  %v89 = vld [vmem:[%s58 + $0x28] sm:$0xf]
  %v90 = vld [vmem:[%s58 + $0x2c] sm:$0xf]
  %v91 = vld [vmem:[%s58 + $0x30] sm:$0xf]
  %v92 = vld [vmem:[%s58 + $0x34] sm:$0xf]
  %v93 = vld [vmem:[%s58 + $0x38] sm:$0xf]
  %v94 = vld [vmem:[%s58 + $0x3c] sm:$0xf]
  %v95 = vlaneseq
  %v96 = vshrl.u32 %v95, 7
  %v97 = vsub.s32 0, %v96
  %v98 = vrot.slane %v62, %v97
  %v115 = vunpack.c.l.b16 %v63
  %v116 = vunpack.c.l.b16 %v64
  %v117 = vunpack.c.l.b16 %v65
  %v118 = vunpack.c.l.b16 %v66
  %v119 = vunpack.c.l.b16 %v67
  %v120 = vunpack.c.l.b16 %v68
  %v121 = vunpack.c.l.b16 %v69
  %v122 = vunpack.c.l.b16 %v70
  %v123 = vunpack.c.l.b16 %v71
  %v124 = vunpack.c.l.b16 %v72
  %v125 = vunpack.c.l.b16 %v73
  %v126 = vunpack.c.l.b16 %v74
  %v127 = vunpack.c.l.b16 %v75
  %v128 = vunpack.c.l.b16 %v76
  %v129 = vunpack.c.l.b16 %v77
  %v130 = vunpack.c.l.b16 %v78
  %v131 = vpack.c.b16 %v116, %v115
  %v132 = vpack.c.b16 %v118, %v117
  %v133 = vpack.c.b16 %v120, %v119
  %v134 = vpack.c.b16 %v122, %v121
  %v135 = vpack.c.b16 %v124, %v123
  %v136 = vpack.c.b16 %v126, %v125
  %v137 = vpack.c.b16 %v128, %v127
  %v138 = vpack.c.b16 %v130, %v129
  %v163 = vunpack.c.l.b16 %v79
  %v164 = vunpack.c.l.b16 %v80
  %v165 = vunpack.c.l.b16 %v81
  %v166 = vunpack.c.l.b16 %v82
  %v167 = vunpack.c.l.b16 %v83
  %v168 = vunpack.c.l.b16 %v84
  %v169 = vunpack.c.l.b16 %v85
  %v170 = vunpack.c.l.b16 %v86
  %v171 = vunpack.c.l.b16 %v87
  %v172 = vunpack.c.l.b16 %v88
  %v173 = vunpack.c.l.b16 %v89
  %v174 = vunpack.c.l.b16 %v90
  %v175 = vunpack.c.l.b16 %v91
  %v176 = vunpack.c.l.b16 %v92
  %v177 = vunpack.c.l.b16 %v93
  %v178 = vunpack.c.l.b16 %v94
  %v179 = vpack.c.b16 %v164, %v163
  %v180 = vpack.c.b16 %v166, %v165
  %v181 = vpack.c.b16 %v168, %v167
  %v182 = vpack.c.b16 %v170, %v169
  %v183 = vpack.c.b16 %v172, %v171
  %v184 = vpack.c.b16 %v174, %v173
  %v185 = vpack.c.b16 %v176, %v175
  %v186 = vpack.c.b16 %v178, %v177
  %195 = vmatprep.subr.bf16.mxu0 0
  %196 = vmatpush1.bf16.msra.mxu0 %v179
  %197 = vmatprep.subr.bf16.mxu0 0
  %198 = vmatpush1.bf16.msra.mxu0 %v180
  %199 = vmatprep.subr.bf16.mxu0 0
  %200 = vmatpush1.bf16.msra.mxu0 %v181
  %201 = vmatprep.subr.bf16.mxu0 0
  %202 = vmatpush1.bf16.msra.mxu0 %v182
  %203 = vmatprep.subr.bf16.mxu0 0
  %204 = vmatpush1.bf16.msra.mxu0 %v183
  %205 = vmatprep.subr.bf16.mxu0 0
  %206 = vmatpush1.bf16.msra.mxu0 %v184
  %207 = vmatprep.subr.bf16.mxu0 0
  %208 = vmatpush1.bf16.msra.mxu0 %v185
  %209 = vmatprep.subr.bf16.mxu0 0
  %210 = vmatpush1.bf16.msra.mxu0 %v186
  %211 = vmatprep.subr.bf16.mxu0 0
  %212 = vmatpush1.bf16.msra.mxu0 0
  %213 = vmatprep.subr.bf16.mxu0 0
  %214 = vmatpush1.bf16.msra.mxu0 0
  %215 = vmatprep.subr.bf16.mxu0 0
  %216 = vmatpush1.bf16.msra.mxu0 0
  %217 = vmatprep.subr.bf16.mxu0 0
  %218 = vmatpush1.bf16.msra.mxu0 0
  %219 = vmatprep.subr.bf16.mxu0 0
  %220 = vmatpush1.bf16.msra.mxu0 0
  %221 = vmatprep.subr.bf16.mxu0 0
  %222 = vmatpush1.bf16.msra.mxu0 0
  %223 = vmatprep.subr.bf16.mxu0 0
  %224 = vmatpush1.bf16.msra.mxu0 0
  %225 = vmatprep.subr.bf16.mxu0 0
  %226 = vmatpush1.bf16.msra.mxu0 0
  %227 = vmatprep.mubr.bf16.mxu0 0
  %228 = vmatmul.mubr.bf16.gmra.mrb[0].mxu0 %v131
  %v229 = vpop.f32.mrb[0].mxu0
  %v230 = vadd.f32 %v98, %v229
  %v231 = vpop.f32.mrb[0].mxu0
  %v232 = vpop.f32.mrb[0].mxu0
  %v233 = vadd.f32 %v98, %v232
  %v234 = vpop.f32.mrb[0].mxu0
  %235 = vmatprep.mubr.bf16.mxu0 0
  %236 = vmatmul.mubr.bf16.gmra.mrb[0].mxu0 %v132
  %v237 = vpop.f32.mrb[0].mxu0
  %v238 = vadd.f32 %v98, %v237
  %v239 = vpop.f32.mrb[0].mxu0
  %v240 = vpop.f32.mrb[0].mxu0
  %v241 = vadd.f32 %v98, %v240
  %v242 = vpop.f32.mrb[0].mxu0
  %243 = vmatprep.mubr.bf16.mxu0 0
  %244 = vmatmul.mubr.bf16.gmra.mrb[0].mxu0 %v133
  %v245 = vpop.f32.mrb[0].mxu0
  %v246 = vadd.f32 %v98, %v245
  %v247 = vpop.f32.mrb[0].mxu0
  %v248 = vpop.f32.mrb[0].mxu0
  %v249 = vadd.f32 %v98, %v248
  %v250 = vpop.f32.mrb[0].mxu0
  %251 = vmatprep.mubr.bf16.mxu0 0
  %252 = vmatmul.mubr.bf16.gmra.mrb[0].mxu0 %v134
  %v253 = vpop.f32.mrb[0].mxu0
  %v254 = vadd.f32 %v98, %v253
  %v255 = vpop.f32.mrb[0].mxu0
  %v256 = vpop.f32.mrb[0].mxu0
  %v257 = vadd.f32 %v98, %v256
  %v258 = vpop.f32.mrb[0].mxu0
  %259 = vmatprep.mubr.bf16.mxu0 0
  %260 = vmatmul.mubr.bf16.gmra.mrb[0].mxu0 %v135
  %v261 = vpop.f32.mrb[0].mxu0
  %v262 = vadd.f32 %v98, %v261
  %v263 = vpop.f32.mrb[0].mxu0
  %v264 = vpop.f32.mrb[0].mxu0
  %v265 = vadd.f32 %v98, %v264
  %v266 = vpop.f32.mrb[0].mxu0
  %267 = vmatprep.mubr.bf16.mxu0 0
  %268 = vmatmul.mubr.bf16.gmra.mrb[0].mxu0 %v136
  %v269 = vpop.f32.mrb[0].mxu0
  %v270 = vadd.f32 %v98, %v269
  %v271 = vpop.f32.mrb[0].mxu0
  %v272 = vpop.f32.mrb[0].mxu0
  %v273 = vadd.f32 %v98, %v272
  %v274 = vpop.f32.mrb[0].mxu0
  %275 = vmatprep.mubr.bf16.mxu0 0
  %276 = vmatmul.mubr.bf16.gmra.mrb[0].mxu0 %v137
  %v277 = vpop.f32.mrb[0].mxu0
  %v278 = vadd.f32 %v98, %v277
  %v279 = vpop.f32.mrb[0].mxu0
  %v280 = vpop.f32.mrb[0].mxu0
  %v281 = vadd.f32 %v98, %v280
  %v282 = vpop.f32.mrb[0].mxu0
  %283 = vmatprep.mubr.bf16.mxu0 0
  %284 = vmatmul.mubr.bf16.gmra.mrb[0].mxu0 %v138
  %v285 = vpop.f32.mrb[0].mxu0
  %v286 = vadd.f32 %v98, %v285
  %v287 = vpop.f32.mrb[0].mxu0
  %v288 = vpop.f32.mrb[0].mxu0
  %v289 = vadd.f32 %v98, %v288
  %v290 = vpop.f32.mrb[0].mxu0
  %291 = vdwg.mxu0
  %v292 = vmax.f32 %v230, 0.0
  %v293 = vmax.f32 %v233, 0.0
  %v294 = vmax.f32 %v238, 0.0
  %v295 = vmax.f32 %v241, 0.0
  %v296 = vmax.f32 %v246, 0.0
  %v297 = vmax.f32 %v249, 0.0
  %v298 = vmax.f32 %v254, 0.0
  %v299 = vmax.f32 %v257, 0.0
  %v300 = vmax.f32 %v262, 0.0
  %v301 = vmax.f32 %v265, 0.0
  %v302 = vmax.f32 %v270, 0.0
  %v303 = vmax.f32 %v273, 0.0
  %v304 = vmax.f32 %v278, 0.0
  %v305 = vmax.f32 %v281, 0.0
  %v306 = vmax.f32 %v286, 0.0
  %v307 = vmax.f32 %v289, 0.0
  %v308 = vld [vmem:[%s4] sm:$0xff]
  %v309 = vld [vmem:[%s4 + $0x8] sm:$0xff]
  %v310 = vld [vmem:[%s4 + $0x10] sm:$0xff]
  %v311 = vld [vmem:[%s4 + $0x18] sm:$0xff]
  %v312 = vld [vmem:[%s4 + $0x20] sm:$0xff]
  %v313 = vld [vmem:[%s4 + $0x28] sm:$0xff]
  %v314 = vld [vmem:[%s4 + $0x30] sm:$0xff]
  %v315 = vld [vmem:[%s4 + $0x38] sm:$0xff]
  %v316 = vlaneseq
  %v317 = vshrl.u32 %v316, 7
  %v318 = vsub.s32 1, %v317
  %v319 = vrot.slane %v62, %v318
  %vm320 = vcmask 523264
  %v322 = vsel %vm320, %v292, 0
  %v325 = vsel %vm320, %v293, 0
  %v328 = vsel %vm320, %v294, 0
  %v331 = vsel %vm320, %v295, 0
  %v334 = vsel %vm320, %v296, 0
  %v337 = vsel %vm320, %v297, 0
  %v340 = vsel %vm320, %v298, 0
  %v343 = vsel %vm320, %v299, 0
  %v346 = vsel %vm320, %v300, 0
  %v349 = vsel %vm320, %v301, 0
  %v352 = vsel %vm320, %v302, 0
  %v355 = vsel %vm320, %v303, 0
  %v358 = vsel %vm320, %v304, 0
  %v361 = vsel %vm320, %v305, 0
  %v364 = vsel %vm320, %v306, 0
  %v367 = vsel %vm320, %v307, 0
  %369 = vmatprep.subr.mxu0 0.0
  %370 = vmatpush1.msra.mxu0 %v308
  %371 = vmatprep.subr.mxu0 0.0
  %372 = vmatpush1.msra.mxu0 %v309
  %373 = vmatprep.subr.mxu0 0.0
  %374 = vmatpush1.msra.mxu0 %v310
  %375 = vmatprep.subr.mxu0 0.0
  %376 = vmatpush1.msra.mxu0 %v311
  %377 = vmatprep.subr.mxu0 0.0
  %378 = vmatpush1.msra.mxu0 %v312
  %379 = vmatprep.subr.mxu0 0.0
  %380 = vmatpush1.msra.mxu0 %v313
  %381 = vmatprep.subr.mxu0 0.0
  %382 = vmatpush1.msra.mxu0 %v314
  %383 = vmatprep.subr.mxu0 0.0
  %384 = vmatpush1.msra.mxu0 %v315
  %385 = vmatprep.subr.mxu0 0.0
  %386 = vmatpush1.msra.mxu0 0.0
  %387 = vmatprep.subr.mxu0 0.0
  %388 = vmatpush1.msra.mxu0 0.0
  %389 = vmatprep.subr.mxu0 0.0
  %390 = vmatpush1.msra.mxu0 0.0
  %391 = vmatprep.subr.mxu0 0.0
  %392 = vmatpush1.msra.mxu0 0.0
  %393 = vmatprep.subr.mxu0 0.0
  %394 = vmatpush1.msra.mxu0 0.0
  %395 = vmatprep.subr.mxu0 0.0
  %396 = vmatpush1.msra.mxu0 0.0
  %397 = vmatprep.subr.mxu0 0.0
  %398 = vmatpush1.msra.mxu0 0.0
  %399 = vmatprep.subr.mxu0 0.0
  %400 = vmatpush1.msra.mxu0 0.0
  %401 = vmatprep.subr.mxu0 0.0
  %402 = vmatpush1.msra.mxu0 0.0
  %403 = vmatprep.subr.mxu0 0.0
  %404 = vmatpush1.msra.mxu0 0.0
  %405 = vmatprep.subr.mxu0 0.0
  %406 = vmatpush1.msra.mxu0 0.0
  %407 = vmatprep.subr.mxu0 0.0
  %408 = vmatpush1.msra.mxu0 0.0
  %409 = vmatprep.subr.mxu0 0.0
  %410 = vmatpush1.msra.mxu0 0.0
  %411 = vmatprep.subr.mxu0 0.0
  %412 = vmatpush1.msra.mxu0 0.0
  %413 = vmatprep.subr.mxu0 0.0
  %414 = vmatpush1.msra.mxu0 0.0
  %415 = vmatprep.subr.mxu0 0.0
  %416 = vmatpush1.msra.mxu0 0.0
  %417 = vmatprep.subr.mxu0 0.0
  %418 = vmatpush1.msra.mxu0 0.0
  %419 = vmatprep.subr.mxu0 0.0
  %420 = vmatpush1.msra.mxu0 0.0
  %421 = vmatprep.subr.mxu0 0.0
  %422 = vmatpush1.msra.mxu0 0.0
  %423 = vmatprep.subr.mxu0 0.0
  %424 = vmatpush1.msra.mxu0 0.0
  %425 = vmatprep.subr.mxu0 0.0
  %426 = vmatpush1.msra.mxu0 0.0
  %427 = vmatprep.subr.mxu0 0.0
  %428 = vmatpush1.msra.mxu0 0.0
  %429 = vmatprep.subr.mxu0 0.0
  %430 = vmatpush1.msra.mxu0 0.0
  %431 = vmatprep.subr.mxu0 0.0
  %432 = vmatpush1.msra.mxu0 0.0
  %433 = vmatprep.mubr.f32.mxu0 0.0
  %434 = vmatmul.mubr.f32.gmra.mrb[0].mxu0 %v322
  %v435 = vpop.f32.mrb[0].mxu0
  %v436 = vadd.f32 %v319, %v435
  %v437 = vpop.f32.mrb[0].mxu0
  %438 = vmatprep.mubr.f32.mxu0 0.0
  %439 = vmatmul.mubr.f32.gmra.mrb[0].mxu0 %v325
  %v440 = vpop.f32.mrb[0].mxu0
  %v441 = vadd.f32 %v319, %v440
  %v442 = vpop.f32.mrb[0].mxu0
  %443 = vmatprep.mubr.f32.mxu0 0.0
  %444 = vmatmul.mubr.f32.gmra.mrb[0].mxu0 %v328
  %v445 = vpop.f32.mrb[0].mxu0
  %v446 = vadd.f32 %v319, %v445
  %v447 = vpop.f32.mrb[0].mxu0
  %448 = vmatprep.mubr.f32.mxu0 0.0
  %449 = vmatmul.mubr.f32.gmra.mrb[0].mxu0 %v331
  %v450 = vpop.f32.mrb[0].mxu0
  %v451 = vadd.f32 %v319, %v450
  %v452 = vpop.f32.mrb[0].mxu0
  %453 = vmatprep.mubr.f32.mxu0 0.0
  %454 = vmatmul.mubr.f32.gmra.mrb[0].mxu0 %v334
  %v455 = vpop.f32.mrb[0].mxu0
  %v456 = vadd.f32 %v319, %v455
  %v457 = vpop.f32.mrb[0].mxu0
  %458 = vmatprep.mubr.f32.mxu0 0.0
  %459 = vmatmul.mubr.f32.gmra.mrb[0].mxu0 %v337
  %v460 = vpop.f32.mrb[0].mxu0
  %v461 = vadd.f32 %v319, %v460
  %v462 = vpop.f32.mrb[0].mxu0
  %463 = vmatprep.mubr.f32.mxu0 0.0
  %464 = vmatmul.mubr.f32.gmra.mrb[0].mxu0 %v340
  %v465 = vpop.f32.mrb[0].mxu0
  %v466 = vadd.f32 %v319, %v465
  %v467 = vpop.f32.mrb[0].mxu0
  %468 = vmatprep.mubr.f32.mxu0 0.0
  %469 = vmatmul.mubr.f32.gmra.mrb[0].mxu0 %v343
  %v470 = vpop.f32.mrb[0].mxu0
  %v471 = vadd.f32 %v319, %v470
  %v472 = vpop.f32.mrb[0].mxu0
  %473 = vmatprep.mubr.f32.mxu0 0.0
  %474 = vmatmul.mubr.f32.gmra.mrb[0].mxu0 %v346
  %v475 = vpop.f32.mrb[0].mxu0
  %v476 = vadd.f32 %v319, %v475
  %v477 = vpop.f32.mrb[0].mxu0
  %478 = vmatprep.mubr.f32.mxu0 0.0
  %479 = vmatmul.mubr.f32.gmra.mrb[0].mxu0 %v349
  %v480 = vpop.f32.mrb[0].mxu0
  %v481 = vadd.f32 %v319, %v480
  %v482 = vpop.f32.mrb[0].mxu0
  %483 = vmatprep.mubr.f32.mxu0 0.0
  %484 = vmatmul.mubr.f32.gmra.mrb[0].mxu0 %v352
  %v485 = vpop.f32.mrb[0].mxu0
  %v486 = vadd.f32 %v319, %v485
  %v487 = vpop.f32.mrb[0].mxu0
  %488 = vmatprep.mubr.f32.mxu0 0.0
  %489 = vmatmul.mubr.f32.gmra.mrb[0].mxu0 %v355
  %v490 = vpop.f32.mrb[0].mxu0
  %v491 = vadd.f32 %v319, %v490
  %v492 = vpop.f32.mrb[0].mxu0
  %493 = vmatprep.mubr.f32.mxu0 0.0
  %494 = vmatmul.mubr.f32.gmra.mrb[0].mxu0 %v358
  %v495 = vpop.f32.mrb[0].mxu0
  %v496 = vadd.f32 %v319, %v495
  %v497 = vpop.f32.mrb[0].mxu0
  %498 = vmatprep.mubr.f32.mxu0 0.0
  %499 = vmatmul.mubr.f32.gmra.mrb[0].mxu0 %v361
  %v500 = vpop.f32.mrb[0].mxu0
  %v501 = vadd.f32 %v319, %v500
  %v502 = vpop.f32.mrb[0].mxu0
  %503 = vmatprep.mubr.f32.mxu0 0.0
  %504 = vmatmul.mubr.f32.gmra.mrb[0].mxu0 %v364
  %v505 = vpop.f32.mrb[0].mxu0
  %v506 = vadd.f32 %v319, %v505
  %v507 = vpop.f32.mrb[0].mxu0
  %508 = vmatprep.mubr.f32.mxu0 0.0
  %509 = vmatmul.mubr.f32.gmra.mrb[0].mxu0 %v367
  %v510 = vpop.f32.mrb[0].mxu0
  %v511 = vadd.f32 %v319, %v510
  %v512 = vpop.f32.mrb[0].mxu0
  %513 = vdwg.mxu0
  %v514 = vmax.f32 %v436, 0.0
  %v515 = vmax.f32 %v441, 0.0
  %v516 = vmax.f32 %v446, 0.0
  %v517 = vmax.f32 %v451, 0.0
  %v518 = vmax.f32 %v456, 0.0
  %v519 = vmax.f32 %v461, 0.0
  %v520 = vmax.f32 %v466, 0.0
  %v521 = vmax.f32 %v471, 0.0
  %v522 = vmax.f32 %v476, 0.0
  %v523 = vmax.f32 %v481, 0.0
  %v524 = vmax.f32 %v486, 0.0
  %v525 = vmax.f32 %v491, 0.0
  %v526 = vmax.f32 %v496, 0.0
  %v527 = vmax.f32 %v501, 0.0
  %v528 = vmax.f32 %v506, 0.0
  %v529 = vmax.f32 %v511, 0.0
  %v530 = vlaneseq
  %v531 = vshrl.u32 %v530, 7
  %v532 = vsub.s32 2, %v531
  %v533 = vrot.slane %v62, %v532
  %v534 = vmul.f32 %v514, %v533
  %v535 = vmul.f32 %v515, %v533
  %v536 = vmul.f32 %v516, %v533
  %v537 = vmul.f32 %v517, %v533
  %v538 = vmul.f32 %v518, %v533
  %v539 = vmul.f32 %v519, %v533
  %v540 = vmul.f32 %v520, %v533
  %v541 = vmul.f32 %v521, %v533
  %v542 = vmul.f32 %v522, %v533
  %v543 = vmul.f32 %v523, %v533
  %v544 = vmul.f32 %v524, %v533
  %v545 = vmul.f32 %v525, %v533
  %v546 = vmul.f32 %v526, %v533
  %v547 = vmul.f32 %v527, %v533
  %v548 = vmul.f32 %v528, %v533
  %v549 = vmul.f32 %v529, %v533
  %550 = vadd.xlane.f32.xlu0 %v534
  %v551 = vpop.xlane.xlu0 %550
  %552 = vadd.xlane.f32.xlu0 %v535
  %v553 = vpop.xlane.xlu0 %552
  %554 = vadd.xlane.f32.xlu0 %v536
  %v555 = vpop.xlane.xlu0 %554
  %556 = vadd.xlane.f32.xlu0 %v537
  %v557 = vpop.xlane.xlu0 %556
  %558 = vadd.xlane.f32.xlu0 %v538
  %v559 = vpop.xlane.xlu0 %558
  %560 = vadd.xlane.f32.xlu0 %v539
  %v561 = vpop.xlane.xlu0 %560
  %562 = vadd.xlane.f32.xlu0 %v540
  %v563 = vpop.xlane.xlu0 %562
  %564 = vadd.xlane.f32.xlu0 %v541
  %v565 = vpop.xlane.xlu0 %564
  %566 = vadd.xlane.f32.xlu0 %v542
  %v567 = vpop.xlane.xlu0 %566
  %568 = vadd.xlane.f32.xlu0 %v543
  %v569 = vpop.xlane.xlu0 %568
  %570 = vadd.xlane.f32.xlu0 %v544
  %v571 = vpop.xlane.xlu0 %570
  %572 = vadd.xlane.f32.xlu0 %v545
  %v573 = vpop.xlane.xlu0 %572
  %574 = vadd.xlane.f32.xlu0 %v546
  %v575 = vpop.xlane.xlu0 %574
  %576 = vadd.xlane.f32.xlu0 %v547
  %v577 = vpop.xlane.xlu0 %576
  %578 = vadd.xlane.f32.xlu0 %v548
  %v579 = vpop.xlane.xlu0 %578
  %580 = vadd.xlane.f32.xlu0 %v549
  %v581 = vpop.xlane.xlu0 %580
  %v582 = vadd.f32 %v551, %v98
  %v583 = vadd.f32 %v553, %v98
  %v584 = vadd.f32 %v555, %v98
  %v585 = vadd.f32 %v557, %v98
  %v586 = vadd.f32 %v559, %v98
  %v587 = vadd.f32 %v561, %v98
  %v588 = vadd.f32 %v563, %v98
  %v589 = vadd.f32 %v565, %v98
  %v590 = vadd.f32 %v567, %v98
  %v591 = vadd.f32 %v569, %v98
  %v592 = vadd.f32 %v571, %v98
  %v593 = vadd.f32 %v573, %v98
  %v594 = vadd.f32 %v575, %v98
  %v595 = vadd.f32 %v577, %v98
  %v596 = vadd.f32 %v579, %v98
  %v597 = vadd.f32 %v581, %v98
  %599 = vset.pattern.permute.xlu0 64
  %600 = vperm.xlu0 %599, %v582
  %v601 = vpop.permute.xlu0 %600
  %604 = vset.pattern.permute.xlu0 64
  %605 = vperm.xlu0 %604, %v583
  %v606 = vpop.permute.xlu0 %605
  %609 = vset.pattern.permute.xlu0 64
  %610 = vperm.xlu0 %609, %v584
  %v611 = vpop.permute.xlu0 %610
  %614 = vset.pattern.permute.xlu0 64
  %615 = vperm.xlu0 %614, %v585
  %v616 = vpop.permute.xlu0 %615
  %619 = vset.pattern.permute.xlu0 64
  %620 = vperm.xlu0 %619, %v586
  %v621 = vpop.permute.xlu0 %620
  %624 = vset.pattern.permute.xlu0 64
  %625 = vperm.xlu0 %624, %v587
  %v626 = vpop.permute.xlu0 %625
  %629 = vset.pattern.permute.xlu0 64
  %630 = vperm.xlu0 %629, %v588
  %v631 = vpop.permute.xlu0 %630
  %634 = vset.pattern.permute.xlu0 64
  %635 = vperm.xlu0 %634, %v589
  %v636 = vpop.permute.xlu0 %635
  %639 = vset.pattern.permute.xlu0 64
  %640 = vperm.xlu0 %639, %v590
  %v641 = vpop.permute.xlu0 %640
  %644 = vset.pattern.permute.xlu0 64
  %645 = vperm.xlu0 %644, %v591
  %v646 = vpop.permute.xlu0 %645
  %649 = vset.pattern.permute.xlu0 64
  %650 = vperm.xlu0 %649, %v592
  %v651 = vpop.permute.xlu0 %650
  %654 = vset.pattern.permute.xlu0 64
  %655 = vperm.xlu0 %654, %v593
  %v656 = vpop.permute.xlu0 %655
  %659 = vset.pattern.permute.xlu0 64
  %660 = vperm.xlu0 %659, %v594
  %v661 = vpop.permute.xlu0 %660
  %664 = vset.pattern.permute.xlu0 64
  %665 = vperm.xlu0 %664, %v595
  %v666 = vpop.permute.xlu0 %665
  %669 = vset.pattern.permute.xlu0 64
  %670 = vperm.xlu0 %669, %v596
  %v671 = vpop.permute.xlu0 %670
  %674 = vset.pattern.permute.xlu0 64
  %675 = vperm.xlu0 %674, %v597
  %v676 = vpop.permute.xlu0 %675
  %v678 = vmul.f32 %v514, %v601
  %v679 = vmul.f32 %v515, %v606
  %v680 = vmul.f32 %v516, %v611
  %v681 = vmul.f32 %v517, %v616
  %v682 = vmul.f32 %v518, %v621
  %v683 = vmul.f32 %v519, %v626
  %v684 = vmul.f32 %v520, %v631
  %v685 = vmul.f32 %v521, %v636
  %v686 = vmul.f32 %v522, %v641
  %v687 = vmul.f32 %v523, %v646
  %v688 = vmul.f32 %v524, %v651
  %v689 = vmul.f32 %v525, %v656
  %v690 = vmul.f32 %v526, %v661
  %v691 = vmul.f32 %v527, %v666
  %v692 = vmul.f32 %v528, %v671
  %v693 = vmul.f32 %v529, %v676
  %v694 = vpack.c.bf16 %v679, %v678
  %v695 = vpack.c.bf16 %v681, %v680
  %v696 = vpack.c.bf16 %v683, %v682
  %v697 = vpack.c.bf16 %v685, %v684
  %v698 = vpack.c.bf16 %v687, %v686
  %v699 = vpack.c.bf16 %v689, %v688
  %v700 = vpack.c.bf16 %v691, %v690
  %v701 = vpack.c.bf16 %v693, %v692
  %v702 = vld [vmem:[%s3] sm:$0x1]
  %703 = vmatprep.subr.bf16.mxu0 0
  %704 = vmatpush1.bf16.msra.mxu0 %v694
  %705 = vmatprep.subr.bf16.mxu0 0
  %706 = vmatpush1.bf16.msra.mxu0 %v695
  %707 = vmatprep.subr.bf16.mxu0 0
  %708 = vmatpush1.bf16.msra.mxu0 %v696
  %709 = vmatprep.subr.bf16.mxu0 0
  %710 = vmatpush1.bf16.msra.mxu0 %v697
  %711 = vmatprep.subr.bf16.mxu0 0
  %712 = vmatpush1.bf16.msra.mxu0 %v698
  %713 = vmatprep.subr.bf16.mxu0 0
  %714 = vmatpush1.bf16.msra.mxu0 %v699
  %715 = vmatprep.subr.bf16.mxu0 0
  %716 = vmatpush1.bf16.msra.mxu0 %v700
  %717 = vmatprep.subr.bf16.mxu0 0
  %718 = vmatpush1.bf16.msra.mxu0 %v701
  %719 = vmatprep.subr.bf16.mxu0 0
  %720 = vmatpush1.bf16.msra.mxu0 0
  %721 = vmatprep.subr.bf16.mxu0 0
  %722 = vmatpush1.bf16.msra.mxu0 0
  %723 = vmatprep.subr.bf16.mxu0 0
  %724 = vmatpush1.bf16.msra.mxu0 0
  %725 = vmatprep.subr.bf16.mxu0 0
  %726 = vmatpush1.bf16.msra.mxu0 0
  %727 = vmatprep.subr.bf16.mxu0 0
  %728 = vmatpush1.bf16.msra.mxu0 0
  %729 = vmatprep.subr.bf16.mxu0 0
  %730 = vmatpush1.bf16.msra.mxu0 0
  %731 = vmatprep.subr.bf16.mxu0 0
  %732 = vmatpush1.bf16.msra.mxu0 0
  %733 = vmatprep.subr.bf16.mxu0 0
  %734 = vmatpush1.bf16.msra.mxu0 0
  %735 = vmatprep.mubr.bf16.mxu0 0
  %736 = vmatmul.mubr.bf16.gmra.mrb[0].mxu0 %v702
  %v737 = vpop.f32.mrb[0].mxu0
  %v738 = vadd.f32 0.0, %v737
  %v739 = vpop.f32.mrb[0].mxu0
  %v740 = vpop.f32.mrb[0].mxu0
  %v741 = vpop.f32.mrb[0].mxu0
  %742 = vdwg.mxu0
  %743 = vst [vmem:[%s6] sm:$0x3] %v738
  // Predicated region
  $region22: #{_encoder_forward_padded.3} parent=0 // pred_check
    _
  $region23: #{_encoder_forward_padded.3} parent=0 // pred_check_branch
    %745 = sbr.rel (0) target = $region25
  $region24: #{_encoder_forward_padded.3} parent=0 // pred_region
    _
  $region25: #{_encoder_forward_padded.3} parent=0 // pred_fallthru
    _
  // Predicated region
  $region26: #{_encoder_forward_padded.3} parent=0 // pred_check
    _
  $region27: #{_encoder_forward_padded.3} parent=0 // pred_check_branch
    %747 = sbr.rel (0) target = $region29
  $region28: #{_encoder_forward_padded.3} parent=0 // pred_region
    _
  $region29: #{_encoder_forward_padded.3} parent=0 // pred_fallthru
    _

</llo_original>
